<compile_context>
chip_gen: v7x
topology: tpu7x:2x2x1
jax: 0.10.0
libtpu: 0.0.40
codegen_flags: <defaults>
</compile_context>

<pallas_src>
import functools

import jax
import jax.numpy as jnp
from jax.experimental import pallas as pl
from jax.experimental.pallas import tpu as pltpu


# ----------------------------------------------------------------------------
# Fused whole-batch kernel (single invocation, B folded into matmul rows)
# ----------------------------------------------------------------------------
def _fused_strep_kernel(means_ref, stds_ref,                 # SMEM scalars (B,)
                        xl_ref, r12_ref, a_ref,              # activations
                        w_xl_ref, w_rec_ref, w_r12_ref,      # fused weights
                        w_fc1_ref, w_fc2_ref, w_fc3_ref, bias_ref,
                        out_ref, ax_ref, *, B, N, C, PRED):
    f32 = jnp.float32

    xl = xl_ref[...]                    # (B*N, 288) f32 — last-day signal, channel 0
    r12 = r12_ref[...]                  # (B*N, 12)  f32 — last 12 steps, channel 0

    # Bias slab: one sublane row per bias, lane offset 0, zero-padded to 6C lanes.
    b_pe = bias_ref[0:1, :C]
    b_lt = bias_ref[1:2, :C]
    b_st = bias_ref[2:3, :C]
    b_fc1 = bias_ref[3:4, :6 * C]
    b_fc2 = bias_ref[4:5, :6 * C]
    b_fc3 = bias_ref[5:6, :PRED]

    # --- fused shared-LHS projections (one MXU pass each, B folded into rows) ---
    # PatternEncoder_patternkeyv2 surrogate + LT_model input projection.
    # TODO(synk): real pattern-bank attention source not provided.
    xl_proj = jnp.dot(xl, w_xl_ref[...], preferred_element_type=f32)       # (BN, 2C)
    pattern = jax.nn.relu(xl_proj[:, :C] + b_pe)                            # (BN, C)
    h_lt = xl_proj[:, C:]                                                    # (BN, C)

    # BatchA_patch_gwnet surrogate input projections (supports_len=2 halves).
    r12_proj = jnp.dot(r12, w_r12_ref[...], preferred_element_type=f32)    # (BN, 2C)
    h1 = r12_proj[:, :C]
    h2 = r12_proj[:, C:]

    # ReconstrucAdjNet surrogate: P @ W_rec (shared weight, B folded).
    pw = jnp.dot(pattern, w_rec_ref[...], preferred_element_type=f32)      # (BN, C)

    # RHS shared by the two adjacency convs that both left-multiply by ap2.
    rhs_shared = jnp.concatenate([h_lt, h1], axis=1)                        # (BN, 2C)

    # --- per-batch adjacency path (tiny (N,N) matmuls, statically unrolled) ---
    s_lt_rows = []
    raw_rows = []
    for bb in range(B):
        lo = bb * N
        p_b = pattern[lo:lo + N]                                            # (N, C)
        pw_b = pw[lo:lo + N]

        # s = (P @ W_rec) @ P^T  — trans_b matmul, no materialized transpose.
        s_b = jax.lax.dot_general(pw_b, p_b, (((1,), (1,)), ((), ())),
                                  preferred_element_type=f32)               # (N, N)
        a_patch = jax.nn.softmax(jax.nn.relu(s_b), axis=-1)                 # A_patch
        ap2 = jax.nn.softmax(a_patch + a_ref[bb], axis=-1)                  # A_patch_2
        ax_ref[bb] = ap2            # TODO(synk): GWN meta-graph Ax surrogate

        # One fused conv: ap2 @ [h_lt | h1]  ->  LT-model conv + first GWN support.
        g12 = jnp.dot(ap2, rhs_shared[lo:lo + N],
                      preferred_element_type=f32)                            # (N, 2C)
        # Second GWN support: A2^T @ h2 — trans_a matmul, no transpose.
        g2 = jax.lax.dot_general(ap2, h2[lo:lo + N], (((0,), (0,)), ((), ())),
                                 preferred_element_type=f32)                 # (N, C)

        s_lt_rows.append(jax.nn.relu(g12[:, :C] + b_lt))        # LT_model surrogate S
        raw_rows.append(jax.nn.relu(g12[:, C:] + g2 + b_st))    # gwnet surrogate raw_emb

    s_lt = jnp.concatenate(s_lt_rows, axis=0)                   # (BN, C)
    raw_emb = jnp.concatenate(raw_rows, axis=0)                 # (BN, C)

    # --- FCNet_Res surrogate: single dot on the lane-concat [raw_emb|pattern|S] ---
    feat = jnp.concatenate([raw_emb, pattern, s_lt], axis=1)    # (BN, 3C)
    h = jax.nn.relu(jnp.dot(feat, w_fc1_ref[...], preferred_element_type=f32) + b_fc1)
    h = h + jax.nn.relu(jnp.dot(h, w_fc2_ref[...], preferred_element_type=f32) + b_fc2)
    out = jnp.dot(h, w_fc3_ref[...], preferred_element_type=f32) + b_fc3    # (BN, PRED)

    # unnorm(out, means, stds): per-batch scalars straight from SMEM.
    # TODO(synk): assumes per-batch scalar mean/std (verify against reference unnorm).
    for bb in range(B):
        lo = bb * N
        out_ref[bb] = out[lo:lo + N] * stds_ref[bb] + means_ref[bb]


# ----------------------------------------------------------------------------
# PatchFSL.forward  /  STRep.forward wrapper
# ----------------------------------------------------------------------------
def patchfsl_forward(packed, x, means, stds, A):
    """Mirrors PatchFSL.forward (patch_encoder == 'pattern' branch)."""
    B, N, L, D = x.shape
    C = packed["w_rec"].shape[0]
    PRED = packed["w_fc3"].shape[1]
    BN = B * N

    # Direct channel-0 slices — no (B,N,D,L) transpose is ever materialized.
    # raw_x_1day.reshape(B,N,24,12) flattens back to the same 288 time steps,
    # so the pattern-encoder input and the LT-model input are the same tensor.
    # TODO(synk): reshape equivalence assumes row-major time ordering as in torch.
    x_long = x[:, :, L - 288:, 0].reshape(BN, 288)               # (B*N, 288) f32
    raw12 = x[:, :, L - 12:, 0].reshape(BN, 12)                  # (B*N, 12)  f32

    kernel = functools.partial(_fused_strep_kernel, B=B, N=N, C=C, PRED=PRED)

    smem = pl.BlockSpec(memory_space=pltpu.MemorySpace.SMEM)
    vmem = pl.BlockSpec(memory_space=pltpu.MemorySpace.VMEM)

    out, meta_graph = pl.pallas_call(
        kernel,
        out_shape=(jax.ShapeDtypeStruct((B, N, PRED), jnp.float32),
                   jax.ShapeDtypeStruct((B, N, N), jnp.float32)),
        in_specs=[smem, smem] + [vmem] * 10,
        out_specs=(vmem, vmem),
    )(means, stds, x_long, raw12, A,
      packed["w_xl"], packed["w_rec"], packed["w_r12"],
      packed["w_fc1"], packed["w_fc2"], packed["w_fc3"], packed["bias"])
    return out, meta_graph


def strep_forward(packed, data_x, means, stds, matrix):
    """STRep.forward(data, matrix) -> (out, meta_graph)."""
    return patchfsl_forward(packed, data_x, means, stds, matrix)


# ----------------------------------------------------------------------------
# Parameter init (surrogate weights) + one-time packing (outside jit)
# ----------------------------------------------------------------------------
def init_params(key, out_channel=16, pred_num=6):
    C = out_channel
    ks = jax.random.split(key, 16)
    w = lambda k, shape, s=0.1: (s * jax.random.normal(k, shape)).astype(jnp.float32)
    z = lambda shape: jnp.zeros(shape, jnp.float32)
    return {
        "w_pe": w(ks[0], (24 * 12, C)),      "b_pe": z((1, C)),
        "w_rec": w(ks[1], (C, C)),
        "w_lt": w(ks[2], (288, C)),          "b_lt": z((1, C)),
        "w_st1": w(ks[3], (12, C)),
        "w_st2": w(ks[4], (12, C)),          "b_st": z((1, C)),
        "w_fc1": w(ks[5], (3 * C, 6 * C)),   "b_fc1": z((1, 6 * C)),
        "w_fc2": w(ks[6], (6 * C, 6 * C)),   "b_fc2": z((1, 6 * C)),
        "w_fc3": w(ks[7], (6 * C, pred_num)), "b_fc3": z((1, pred_num)),
    }


def pack_params(params):
    """One-time weight fusion / bias packing (done once, outside the jit)."""
    C = params["w_rec"].shape[0]
    W = 6 * C
    pad = lambda v: jnp.pad(v, ((0, 0), (0, W - v.shape[1])))
    bias = jnp.concatenate([
        pad(params["b_pe"]), pad(params["b_lt"]), pad(params["b_st"]),
        params["b_fc1"], params["b_fc2"], pad(params["b_fc3"])], axis=0)  # (6, 6C)
    return {
        "w_xl": jnp.concatenate([params["w_pe"], params["w_lt"]], axis=1),     # (288, 2C)
        "w_r12": jnp.concatenate([params["w_st1"], params["w_st2"]], axis=1),  # (12, 2C)
        "w_rec": params["w_rec"],
        "w_fc1": params["w_fc1"],
        "w_fc2": params["w_fc2"],
        "w_fc3": params["w_fc3"],
        "bias": bias,
    }


# ----------------------------------------------------------------------------
# Main
# ----------------------------------------------------------------------------
if __name__ == "__main__":
    B, N, L, D = 2, 8, 288, 2          # his_num must be >= 288 (1-day window)
    C, PRED = 16, 6

    key = jax.random.PRNGKey(0)
    k_x, k_a, k_m, k_s, k_p = jax.random.split(key, 5)

    x = jax.random.normal(k_x, (B, N, L, D), dtype=jnp.float32)        # data.x
    A = jax.nn.softmax(jax.random.normal(k_a, (B, N, N)), axis=-1).astype(jnp.float32)
    means = jax.random.normal(k_m, (B,), dtype=jnp.float32)
    stds = jnp.abs(jax.random.normal(k_s, (B,), dtype=jnp.float32)) + 0.5

    params = init_params(k_p, out_channel=C, pred_num=PRED)
    packed = pack_params(params)        # weight fusion happens exactly once

    fwd = jax.jit(strep_forward)
    out, meta_graph = fwd(packed, x, means, stds, A)
    out = jax.block_until_ready(out)
    meta_graph = jax.block_until_ready(meta_graph)

    assert out.shape == (B, N, PRED), out.shape
    assert meta_graph.shape == (B, N, N), meta_graph.shape
    assert bool(jnp.all(jnp.isfinite(out)))
    assert bool(jnp.all(jnp.isfinite(meta_graph)))
    print("KERNEL_OK")
</pallas_src>

<mosaic_0001>
module attributes {stable_mosaic.version = 11 : i64} {
  func.func @_fused_strep_kernel(%arg0: memref<2xf32, #tpu.memory_space<smem>>, %arg1: memref<2xf32, #tpu.memory_space<smem>>, %arg2: memref<16x288xf32, #tpu.memory_space<vmem>>, %arg3: memref<16x12xf32, #tpu.memory_space<vmem>>, %arg4: memref<2x8x8xf32, #tpu.memory_space<vmem>>, %arg5: memref<288x32xf32, #tpu.memory_space<vmem>>, %arg6: memref<16x16xf32, #tpu.memory_space<vmem>>, %arg7: memref<12x32xf32, #tpu.memory_space<vmem>>, %arg8: memref<48x96xf32, #tpu.memory_space<vmem>>, %arg9: memref<96x96xf32, #tpu.memory_space<vmem>>, %arg10: memref<96x6xf32, #tpu.memory_space<vmem>>, %arg11: memref<6x96xf32, #tpu.memory_space<vmem>>, %arg12: memref<2x8x6xf32, #tpu.memory_space<vmem>>, %arg13: memref<2x8x8xf32, #tpu.memory_space<vmem>>) attributes {dimension_semantics = [], scalar_prefetch = 0 : i64, scratch_operands = 0 : i64, tpu.core_type = #tpu.core_type<tc>} {
    %c0 = arith.constant 0 : index
    %c0_0 = arith.constant 0 : index
    %0 = vector.load %arg2[%c0, %c0_0] : memref<16x288xf32, #tpu.memory_space<vmem>>, vector<16x288xf32>
    %c0_1 = arith.constant 0 : index
    %c0_2 = arith.constant 0 : index
    %1 = vector.load %arg3[%c0_1, %c0_2] : memref<16x12xf32, #tpu.memory_space<vmem>>, vector<16x12xf32>
    %c0_3 = arith.constant 0 : index
    %c0_4 = arith.constant 0 : index
    %2 = vector.load %arg11[%c0_3, %c0_4] : memref<6x96xf32, #tpu.memory_space<vmem>>, vector<1x16xf32>
    %c1 = arith.constant 1 : index
    %c0_5 = arith.constant 0 : index
    %3 = vector.load %arg11[%c1, %c0_5] : memref<6x96xf32, #tpu.memory_space<vmem>>, vector<1x16xf32>
    %c2 = arith.constant 2 : index
    %c0_6 = arith.constant 0 : index
    %4 = vector.load %arg11[%c2, %c0_6] : memref<6x96xf32, #tpu.memory_space<vmem>>, vector<1x16xf32>
    %c3 = arith.constant 3 : index
    %c0_7 = arith.constant 0 : index
    %5 = vector.load %arg11[%c3, %c0_7] : memref<6x96xf32, #tpu.memory_space<vmem>>, vector<1x96xf32>
    %c4 = arith.constant 4 : index
    %c0_8 = arith.constant 0 : index
    %6 = vector.load %arg11[%c4, %c0_8] : memref<6x96xf32, #tpu.memory_space<vmem>>, vector<1x96xf32>
    %c5 = arith.constant 5 : index
    %c0_9 = arith.constant 0 : index
    %7 = vector.load %arg11[%c5, %c0_9] : memref<6x96xf32, #tpu.memory_space<vmem>>, vector<1x6xf32>
    %c0_10 = arith.constant 0 : index
    %c0_11 = arith.constant 0 : index
    %8 = vector.load %arg5[%c0_10, %c0_11] : memref<288x32xf32, #tpu.memory_space<vmem>>, vector<288x32xf32>
    %cst = arith.constant dense<0.000000e+00> : vector<16x32xf32>
    %9 = tpu.matmul %0, %8, %cst {dimension_numbers = #tpu.dot_dimension_numbers<[1], [0], [0], [1], [0, 0, 1, 1], [], []>} : vector<16x288xf32>, vector<288x32xf32>, vector<16x32xf32> -> vector<16x32xf32>
    %10 = vector.extract_strided_slice %9 {offsets = [0, 0], sizes = [16, 16], strides = [1, 1]} : vector<16x32xf32> to vector<16x16xf32>
    %11 = vector.broadcast %2 : vector<1x16xf32> to vector<16x16xf32>
    %12 = arith.addf %10, %11 : vector<16x16xf32>
    %cst_12 = arith.constant 0.000000e+00 : f32
    %13 = vector.broadcast %cst_12 : f32 to vector<16x16xf32>
    %14 = arith.maximumf %12, %13 : vector<16x16xf32>
    %15 = vector.extract_strided_slice %9 {offsets = [0, 16], sizes = [16, 16], strides = [1, 1]} : vector<16x32xf32> to vector<16x16xf32>
    %c0_13 = arith.constant 0 : index
    %c0_14 = arith.constant 0 : index
    %16 = vector.load %arg7[%c0_13, %c0_14] : memref<12x32xf32, #tpu.memory_space<vmem>>, vector<12x32xf32>
    %cst_15 = arith.constant dense<0.000000e+00> : vector<16x32xf32>
    %17 = tpu.matmul %1, %16, %cst_15 {dimension_numbers = #tpu.dot_dimension_numbers<[1], [0], [0], [1], [0, 0, 1, 1], [], []>} : vector<16x12xf32>, vector<12x32xf32>, vector<16x32xf32> -> vector<16x32xf32>
    %18 = vector.extract_strided_slice %17 {offsets = [0, 0], sizes = [16, 16], strides = [1, 1]} : vector<16x32xf32> to vector<16x16xf32>
    %19 = vector.extract_strided_slice %17 {offsets = [0, 16], sizes = [16, 16], strides = [1, 1]} : vector<16x32xf32> to vector<16x16xf32>
    %c0_16 = arith.constant 0 : index
    %c0_17 = arith.constant 0 : index
    %20 = vector.load %arg6[%c0_16, %c0_17] : memref<16x16xf32, #tpu.memory_space<vmem>>, vector<16x16xf32>
    %cst_18 = arith.constant dense<0.000000e+00> : vector<16x16xf32>
    %21 = tpu.matmul %14, %20, %cst_18 {dimension_numbers = #tpu.dot_dimension_numbers<[1], [0], [0], [1], [0, 0, 1, 1], [], []>} : vector<16x16xf32>, vector<16x16xf32>, vector<16x16xf32> -> vector<16x16xf32>
    %22 = tpu.concatenate %15, %18 in 1 : vector<16x16xf32>, vector<16x16xf32> -> vector<16x32xf32>
    %23 = vector.extract_strided_slice %14 {offsets = [0, 0], sizes = [8, 16], strides = [1, 1]} : vector<16x16xf32> to vector<8x16xf32>
    %24 = vector.extract_strided_slice %21 {offsets = [0, 0], sizes = [8, 16], strides = [1, 1]} : vector<16x16xf32> to vector<8x16xf32>
    %cst_19 = arith.constant dense<0.000000e+00> : vector<8x8xf32>
    %25 = tpu.matmul %24, %23, %cst_19 {dimension_numbers = #tpu.dot_dimension_numbers<[1], [1], [0], [0], [0, 0, 1, 0], [], []>} : vector<8x16xf32>, vector<8x16xf32>, vector<8x8xf32> -> vector<8x8xf32>
    %cst_20 = arith.constant 0.000000e+00 : f32
    %26 = vector.broadcast %cst_20 : f32 to vector<8x8xf32>
    %27 = arith.maximumf %25, %26 : vector<8x8xf32>
    %cst_21 = arith.constant dense<0xFF800000> : vector<8xf32>
    %28 = vector.multi_reduction <maximumf>, %27, %cst_21 [1] : vector<8x8xf32> to vector<8xf32>
    %cst_22 = arith.constant 0xFF800000 : f32
    %29 = vector.broadcast %cst_22 : f32 to vector<8xf32>
    %30 = arith.maximumf %29, %28 : vector<8xf32>
    %31 = vector.shape_cast %30 : vector<8xf32> to vector<8x1xf32>
    %32 = vector.broadcast %31 : vector<8x1xf32> to vector<8x8xf32>
    %33 = arith.subf %27, %32 : vector<8x8xf32>
    %34 = math.exp %33 : vector<8x8xf32>
    %cst_23 = arith.constant dense<0.000000e+00> : vector<8xf32>
    %35 = vector.multi_reduction <add>, %34, %cst_23 [1] : vector<8x8xf32> to vector<8xf32>
    %36 = vector.shape_cast %35 : vector<8xf32> to vector<8x1xf32>
    %37 = vector.broadcast %36 : vector<8x1xf32> to vector<8x8xf32>
    %38 = arith.divf %34, %37 : vector<8x8xf32>
    %c0_24 = arith.constant 0 : index
    %c0_25 = arith.constant 0 : index
    %c0_26 = arith.constant 0 : index
    %39 = vector.load %arg4[%c0_24, %c0_25, %c0_26] : memref<2x8x8xf32, #tpu.memory_space<vmem>>, vector<1x8x8xf32>
    %40 = vector.shape_cast %39 : vector<1x8x8xf32> to vector<8x8xf32>
    %41 = arith.addf %38, %40 : vector<8x8xf32>
    %cst_27 = arith.constant dense<0xFF800000> : vector<8xf32>
    %42 = vector.multi_reduction <maximumf>, %41, %cst_27 [1] : vector<8x8xf32> to vector<8xf32>
    %cst_28 = arith.constant 0xFF800000 : f32
    %43 = vector.broadcast %cst_28 : f32 to vector<8xf32>
    %44 = arith.maximumf %43, %42 : vector<8xf32>
    %45 = vector.shape_cast %44 : vector<8xf32> to vector<8x1xf32>
    %46 = vector.broadcast %45 : vector<8x1xf32> to vector<8x8xf32>
    %47 = arith.subf %41, %46 : vector<8x8xf32>
    %48 = math.exp %47 : vector<8x8xf32>
    %cst_29 = arith.constant dense<0.000000e+00> : vector<8xf32>
    %49 = vector.multi_reduction <add>, %48, %cst_29 [1] : vector<8x8xf32> to vector<8xf32>
    %50 = vector.shape_cast %49 : vector<8xf32> to vector<8x1xf32>
    %51 = vector.broadcast %50 : vector<8x1xf32> to vector<8x8xf32>
    %52 = arith.divf %48, %51 : vector<8x8xf32>
    %c0_30 = arith.constant 0 : index
    %c0_31 = arith.constant 0 : index
    %c0_32 = arith.constant 0 : index
    %53 = vector.load %arg13[%c0_30, %c0_31, %c0_32] : memref<2x8x8xf32, #tpu.memory_space<vmem>>, vector<1x8x8xf32>
    %54 = vector.shape_cast %53 : vector<1x8x8xf32> to vector<8x8xf32>
    %55 = vector.shape_cast %52 : vector<8x8xf32> to vector<1x8x8xf32>
    tpu.vector_store %arg13[%c0_30, %c0_31, %c0_32], %55 {strides = array<i32>} : memref<2x8x8xf32, #tpu.memory_space<vmem>>, vector<1x8x8xf32>,
    %56 = vector.extract_strided_slice %22 {offsets = [0, 0], sizes = [8, 32], strides = [1, 1]} : vector<16x32xf32> to vector<8x32xf32>
    %cst_33 = arith.constant dense<0.000000e+00> : vector<8x32xf32>
    %57 = tpu.matmul %52, %56, %cst_33 {dimension_numbers = #tpu.dot_dimension_numbers<[1], [0], [0], [1], [0, 0, 1, 1], [], []>} : vector<8x8xf32>, vector<8x32xf32>, vector<8x32xf32> -> vector<8x32xf32>
    %58 = vector.extract_strided_slice %19 {offsets = [0, 0], sizes = [8, 16], strides = [1, 1]} : vector<16x16xf32> to vector<8x16xf32>
    %cst_34 = arith.constant dense<0.000000e+00> : vector<8x16xf32>
    %59 = tpu.matmul %52, %58, %cst_34 {dimension_numbers = #tpu.dot_dimension_numbers<[0], [0], [1], [1], [0, 1, 1, 1], [], []>} : vector<8x8xf32>, vector<8x16xf32>, vector<8x16xf32> -> vector<8x16xf32>
    %60 = vector.extract_strided_slice %57 {offsets = [0, 0], sizes = [8, 16], strides = [1, 1]} : vector<8x32xf32> to vector<8x16xf32>
    %61 = vector.broadcast %3 : vector<1x16xf32> to vector<8x16xf32>
    %62 = arith.addf %60, %61 : vector<8x16xf32>
    %cst_35 = arith.constant 0.000000e+00 : f32
    %63 = vector.broadcast %cst_35 : f32 to vector<8x16xf32>
    %64 = arith.maximumf %62, %63 : vector<8x16xf32>
    %65 = vector.extract_strided_slice %57 {offsets = [0, 16], sizes = [8, 16], strides = [1, 1]} : vector<8x32xf32> to vector<8x16xf32>
    %66 = arith.addf %65, %59 : vector<8x16xf32>
    %67 = vector.broadcast %4 : vector<1x16xf32> to vector<8x16xf32>
    %68 = arith.addf %66, %67 : vector<8x16xf32>
    %cst_36 = arith.constant 0.000000e+00 : f32
    %69 = vector.broadcast %cst_36 : f32 to vector<8x16xf32>
    %70 = arith.maximumf %68, %69 : vector<8x16xf32>
    %71 = vector.extract_strided_slice %14 {offsets = [8, 0], sizes = [8, 16], strides = [1, 1]} : vector<16x16xf32> to vector<8x16xf32>
    %72 = vector.extract_strided_slice %21 {offsets = [8, 0], sizes = [8, 16], strides = [1, 1]} : vector<16x16xf32> to vector<8x16xf32>
    %cst_37 = arith.constant dense<0.000000e+00> : vector<8x8xf32>
    %73 = tpu.matmul %72, %71, %cst_37 {dimension_numbers = #tpu.dot_dimension_numbers<[1], [1], [0], [0], [0, 0, 1, 0], [], []>} : vector<8x16xf32>, vector<8x16xf32>, vector<8x8xf32> -> vector<8x8xf32>
    %cst_38 = arith.constant 0.000000e+00 : f32
    %74 = vector.broadcast %cst_38 : f32 to vector<8x8xf32>
    %75 = arith.maximumf %73, %74 : vector<8x8xf32>
    %cst_39 = arith.constant dense<0xFF800000> : vector<8xf32>
    %76 = vector.multi_reduction <maximumf>, %75, %cst_39 [1] : vector<8x8xf32> to vector<8xf32>
    %cst_40 = arith.constant 0xFF800000 : f32
    %77 = vector.broadcast %cst_40 : f32 to vector<8xf32>
    %78 = arith.maximumf %77, %76 : vector<8xf32>
    %79 = vector.shape_cast %78 : vector<8xf32> to vector<8x1xf32>
    %80 = vector.broadcast %79 : vector<8x1xf32> to vector<8x8xf32>
    %81 = arith.subf %75, %80 : vector<8x8xf32>
    %82 = math.exp %81 : vector<8x8xf32>
    %cst_41 = arith.constant dense<0.000000e+00> : vector<8xf32>
    %83 = vector.multi_reduction <add>, %82, %cst_41 [1] : vector<8x8xf32> to vector<8xf32>
    %84 = vector.shape_cast %83 : vector<8xf32> to vector<8x1xf32>
    %85 = vector.broadcast %84 : vector<8x1xf32> to vector<8x8xf32>
    %86 = arith.divf %82, %85 : vector<8x8xf32>
    %c1_42 = arith.constant 1 : index
    %c0_43 = arith.constant 0 : index
    %c0_44 = arith.constant 0 : index
    %87 = vector.load %arg4[%c1_42, %c0_43, %c0_44] : memref<2x8x8xf32, #tpu.memory_space<vmem>>, vector<1x8x8xf32>
    %88 = vector.shape_cast %87 : vector<1x8x8xf32> to vector<8x8xf32>
    %89 = arith.addf %86, %88 : vector<8x8xf32>
    %cst_45 = arith.constant dense<0xFF800000> : vector<8xf32>
    %90 = vector.multi_reduction <maximumf>, %89, %cst_45 [1] : vector<8x8xf32> to vector<8xf32>
    %cst_46 = arith.constant 0xFF800000 : f32
    %91 = vector.broadcast %cst_46 : f32 to vector<8xf32>
    %92 = arith.maximumf %91, %90 : vector<8xf32>
    %93 = vector.shape_cast %92 : vector<8xf32> to vector<8x1xf32>
    %94 = vector.broadcast %93 : vector<8x1xf32> to vector<8x8xf32>
    %95 = arith.subf %89, %94 : vector<8x8xf32>
    %96 = math.exp %95 : vector<8x8xf32>
    %cst_47 = arith.constant dense<0.000000e+00> : vector<8xf32>
    %97 = vector.multi_reduction <add>, %96, %cst_47 [1] : vector<8x8xf32> to vector<8xf32>
    %98 = vector.shape_cast %97 : vector<8xf32> to vector<8x1xf32>
    %99 = vector.broadcast %98 : vector<8x1xf32> to vector<8x8xf32>
    %100 = arith.divf %96, %99 : vector<8x8xf32>
    %c1_48 = arith.constant 1 : index
    %c0_49 = arith.constant 0 : index
    %c0_50 = arith.constant 0 : index
    %101 = vector.load %arg13[%c1_48, %c0_49, %c0_50] : memref<2x8x8xf32, #tpu.memory_space<vmem>>, vector<1x8x8xf32>
    %102 = vector.shape_cast %101 : vector<1x8x8xf32> to vector<8x8xf32>
    %103 = vector.shape_cast %100 : vector<8x8xf32> to vector<1x8x8xf32>
    tpu.vector_store %arg13[%c1_48, %c0_49, %c0_50], %103 {strides = array<i32>} : memref<2x8x8xf32, #tpu.memory_space<vmem>>, vector<1x8x8xf32>,
    %104 = vector.extract_strided_slice %22 {offsets = [8, 0], sizes = [8, 32], strides = [1, 1]} : vector<16x32xf32> to vector<8x32xf32>
    %cst_51 = arith.constant dense<0.000000e+00> : vector<8x32xf32>
    %105 = tpu.matmul %100, %104, %cst_51 {dimension_numbers = #tpu.dot_dimension_numbers<[1], [0], [0], [1], [0, 0, 1, 1], [], []>} : vector<8x8xf32>, vector<8x32xf32>, vector<8x32xf32> -> vector<8x32xf32>
    %106 = vector.extract_strided_slice %19 {offsets = [8, 0], sizes = [8, 16], strides = [1, 1]} : vector<16x16xf32> to vector<8x16xf32>
    %cst_52 = arith.constant dense<0.000000e+00> : vector<8x16xf32>
    %107 = tpu.matmul %100, %106, %cst_52 {dimension_numbers = #tpu.dot_dimension_numbers<[0], [0], [1], [1], [0, 1, 1, 1], [], []>} : vector<8x8xf32>, vector<8x16xf32>, vector<8x16xf32> -> vector<8x16xf32>
    %108 = vector.extract_strided_slice %105 {offsets = [0, 0], sizes = [8, 16], strides = [1, 1]} : vector<8x32xf32> to vector<8x16xf32>
    %109 = vector.broadcast %3 : vector<1x16xf32> to vector<8x16xf32>
    %110 = arith.addf %108, %109 : vector<8x16xf32>
    %cst_53 = arith.constant 0.000000e+00 : f32
    %111 = vector.broadcast %cst_53 : f32 to vector<8x16xf32>
    %112 = arith.maximumf %110, %111 : vector<8x16xf32>
    %113 = vector.extract_strided_slice %105 {offsets = [0, 16], sizes = [8, 16], strides = [1, 1]} : vector<8x32xf32> to vector<8x16xf32>
    %114 = arith.addf %113, %107 : vector<8x16xf32>
    %115 = vector.broadcast %4 : vector<1x16xf32> to vector<8x16xf32>
    %116 = arith.addf %114, %115 : vector<8x16xf32>
    %cst_54 = arith.constant 0.000000e+00 : f32
    %117 = vector.broadcast %cst_54 : f32 to vector<8x16xf32>
    %118 = arith.maximumf %116, %117 : vector<8x16xf32>
    %119 = tpu.concatenate %64, %112 in 0 : vector<8x16xf32>, vector<8x16xf32> -> vector<16x16xf32>
    %120 = tpu.concatenate %70, %118 in 0 : vector<8x16xf32>, vector<8x16xf32> -> vector<16x16xf32>
    %121 = tpu.concatenate %120, %14, %119 in 1 : vector<16x16xf32>, vector<16x16xf32>, vector<16x16xf32> -> vector<16x48xf32>
    %c0_55 = arith.constant 0 : index
    %c0_56 = arith.constant 0 : index
    %122 = vector.load %arg8[%c0_55, %c0_56] : memref<48x96xf32, #tpu.memory_space<vmem>>, vector<48x96xf32>
    %cst_57 = arith.constant dense<0.000000e+00> : vector<16x96xf32>
    %123 = tpu.matmul %121, %122, %cst_57 {dimension_numbers = #tpu.dot_dimension_numbers<[1], [0], [0], [1], [0, 0, 1, 1], [], []>} : vector<16x48xf32>, vector<48x96xf32>, vector<16x96xf32> -> vector<16x96xf32>
    %124 = vector.broadcast %5 : vector<1x96xf32> to vector<16x96xf32>
    %125 = arith.addf %123, %124 : vector<16x96xf32>
    %cst_58 = arith.constant 0.000000e+00 : f32
    %126 = vector.broadcast %cst_58 : f32 to vector<16x96xf32>
    %127 = arith.maximumf %125, %126 : vector<16x96xf32>
    %c0_59 = arith.constant 0 : index
    %c0_60 = arith.constant 0 : index
    %128 = vector.load %arg9[%c0_59, %c0_60] : memref<96x96xf32, #tpu.memory_space<vmem>>, vector<96x96xf32>
    %cst_61 = arith.constant dense<0.000000e+00> : vector<16x96xf32>
    %129 = tpu.matmul %127, %128, %cst_61 {dimension_numbers = #tpu.dot_dimension_numbers<[1], [0], [0], [1], [0, 0, 1, 1], [], []>} : vector<16x96xf32>, vector<96x96xf32>, vector<16x96xf32> -> vector<16x96xf32>
    %130 = vector.broadcast %6 : vector<1x96xf32> to vector<16x96xf32>
    %131 = arith.addf %129, %130 : vector<16x96xf32>
    %cst_62 = arith.constant 0.000000e+00 : f32
    %132 = vector.broadcast %cst_62 : f32 to vector<16x96xf32>
    %133 = arith.maximumf %131, %132 : vector<16x96xf32>
    %134 = arith.addf %127, %133 : vector<16x96xf32>
    %c0_63 = arith.constant 0 : index
    %c0_64 = arith.constant 0 : index
    %135 = vector.load %arg10[%c0_63, %c0_64] : memref<96x6xf32, #tpu.memory_space<vmem>>, vector<96x6xf32>
    %cst_65 = arith.constant dense<0.000000e+00> : vector<16x6xf32>
    %136 = tpu.matmul %134, %135, %cst_65 {dimension_numbers = #tpu.dot_dimension_numbers<[1], [0], [0], [1], [0, 0, 1, 1], [], []>} : vector<16x96xf32>, vector<96x6xf32>, vector<16x6xf32> -> vector<16x6xf32>
    %137 = vector.broadcast %7 : vector<1x6xf32> to vector<16x6xf32>
    %138 = arith.addf %136, %137 : vector<16x6xf32>
    %139 = vector.extract_strided_slice %138 {offsets = [0, 0], sizes = [8, 6], strides = [1, 1]} : vector<16x6xf32> to vector<8x6xf32>
    %c0_66 = arith.constant 0 : index
    %140 = memref.load %arg1[%c0_66] : memref<2xf32, #tpu.memory_space<smem>>
    %141 = vector.broadcast %140 : f32 to vector<8x6xf32>
    %142 = arith.mulf %139, %141 : vector<8x6xf32>
    %c0_67 = arith.constant 0 : index
    %143 = memref.load %arg0[%c0_67] : memref<2xf32, #tpu.memory_space<smem>>
    %144 = vector.broadcast %143 : f32 to vector<8x6xf32>
    %145 = arith.addf %142, %144 : vector<8x6xf32>
    %c0_68 = arith.constant 0 : index
    %c0_69 = arith.constant 0 : index
    %c0_70 = arith.constant 0 : index
    %146 = vector.load %arg12[%c0_68, %c0_69, %c0_70] : memref<2x8x6xf32, #tpu.memory_space<vmem>>, vector<1x8x6xf32>
    %147 = vector.shape_cast %146 : vector<1x8x6xf32> to vector<8x6xf32>
    %148 = vector.shape_cast %145 : vector<8x6xf32> to vector<1x8x6xf32>
    tpu.vector_store %arg12[%c0_68, %c0_69, %c0_70], %148 {strides = array<i32>} : memref<2x8x6xf32, #tpu.memory_space<vmem>>, vector<1x8x6xf32>,
    %149 = vector.extract_strided_slice %138 {offsets = [8, 0], sizes = [8, 6], strides = [1, 1]} : vector<16x6xf32> to vector<8x6xf32>
    %c1_71 = arith.constant 1 : index
    %150 = memref.load %arg1[%c1_71] : memref<2xf32, #tpu.memory_space<smem>>
    %151 = vector.broadcast %150 : f32 to vector<8x6xf32>
    %152 = arith.mulf %149, %151 : vector<8x6xf32>
    %c1_72 = arith.constant 1 : index
    %153 = memref.load %arg0[%c1_72] : memref<2xf32, #tpu.memory_space<smem>>
    %154 = vector.broadcast %153 : f32 to vector<8x6xf32>
    %155 = arith.addf %152, %154 : vector<8x6xf32>
    %c1_73 = arith.constant 1 : index
    %c0_74 = arith.constant 0 : index
    %c0_75 = arith.constant 0 : index
    %156 = vector.load %arg12[%c1_73, %c0_74, %c0_75] : memref<2x8x6xf32, #tpu.memory_space<vmem>>, vector<1x8x6xf32>
    %157 = vector.shape_cast %156 : vector<1x8x6xf32> to vector<8x6xf32>
    %158 = vector.shape_cast %155 : vector<8x6xf32> to vector<1x8x6xf32>
    tpu.vector_store %arg12[%c1_73, %c0_74, %c0_75], %158 {strides = array<i32>} : memref<2x8x6xf32, #tpu.memory_space<vmem>>, vector<1x8x6xf32>,
    return
  }
}

</mosaic_0001>

<llo_original>
// kernel: strep_forward.1
$region0: #{strep_forward.1}
  #allocation0 [shape = 'u32[]', space=smem, size = 0x4, offset = 0x4, fixed_abs, tag = 'smem constant byte address 0x4 - core index']
  #allocation1 [shape = 'u32[144,128]{1,0:T(1,128)}', space=vmem, size = 0x12000, scoped, tag = 'internal scratch']
  %s0 = inlined_call_operand.vmem [shape: f32[2], index: 0, kind: input, shape index: {}]
  %s1 = inlined_call_operand.vmem [shape: f32[2], index: 1, kind: input, shape index: {}]
  %s2 = inlined_call_operand.vmem [shape: f32[16,288], index: 2, kind: input, shape index: {}]
  %s3 = inlined_call_operand.vmem [shape: f32[16,12], index: 3, kind: input, shape index: {}]
  %s4 = inlined_call_operand.vmem [shape: f32[2,8,8], index: 4, kind: input, shape index: {}]
  %s5 = inlined_call_operand.vmem [shape: f32[288,32], index: 5, kind: input, shape index: {}]
  %s6 = inlined_call_operand.vmem [shape: f32[16,16], index: 6, kind: input, shape index: {}]
  %s7 = inlined_call_operand.vmem [shape: f32[12,32], index: 7, kind: input, shape index: {}]
  %s8 = inlined_call_operand.vmem [shape: f32[48,96], index: 8, kind: input, shape index: {}]
  %s9 = inlined_call_operand.vmem [shape: f32[96,96], index: 9, kind: input, shape index: {}]
  %s10 = inlined_call_operand.vmem [shape: f32[96,6], index: 10, kind: input, shape index: {}]
  %s11 = inlined_call_operand.vmem [shape: f32[6,96], index: 11, kind: input, shape index: {}]
  %s12 = inlined_call_operand.vmem [shape: f32[2,8,6], index: 12, kind: output, shape index: {0}]
  %s13 = inlined_call_operand.hbm [shape: f32[2,8,8], index: 13, kind: output, shape index: {1}]
  %14 = xla_tuple %s12, %s13
  %s15 = sld [smem:[#allocation0]]
  $region74: #{strep_forward.1} parent=0
    _
  %s17 = ssub.s32 1, %s15
  %s18 = scalar_select 0, %s17, %s15
  $region1: #{strep_forward.1} parent=0
    #allocation2 [shape = 'u8[512]{0}', space=smem, size = 0x200, scoped, tag = 'input window, operand 0, single buffered']
    #allocation3 [shape = 's32[1]{0}', space=sflag, size = 0x4, scoped, tag = 'scoped memory for strep_forward.1']
    #allocation4 [shape = 's32[1]{0}', space=sflag, size = 0x4, scoped, tag = 'scoped memory for strep_forward.1']
    #allocation5 [shape = 'u8[512]{0}', space=smem, size = 0x200, scoped, tag = 'input window, operand 1, single buffered']
    #allocation6 [shape = 's32[1]{0}', space=sflag, size = 0x4, scoped, tag = 'scoped memory for strep_forward.1']
    #allocation7 [shape = 'u8[8192]{0}', space=vmem, size = 0x2000, scoped, tag = 'output window, operand 1, single buffered']
    %19 = vsyncpa [#allocation4], 0
    %20 = vsyncpa [#allocation6], 0
    %21 = vsyncpa [#allocation3], 0
    // Predicated region
    $region2: #{strep_forward.1} parent=1 // pred_check
      _
    $region3: #{strep_forward.1} parent=1 // pred_check_branch
      %23 = sbr.rel (0) target = $region5
    $region4: #{strep_forward.1} parent=1 // pred_region
      %s25 = ssub.s32 16, 16
      %26 = vsyncadd [#allocation4], %s25
      %s28 = sshll.u32 %s0, 4
      %s29 = int_to_ptr.vmem [resolvable:$true] %s28
      %31 = dma.vmem_to_smem %s29, 16, [#allocation2], [#allocation4]
    $region5: #{strep_forward.1} parent=1 // pred_fallthru
      _
    // Predicated region
    $region6: #{strep_forward.1} parent=1 // pred_check
      _
    $region7: #{strep_forward.1} parent=1 // pred_check_branch
      %33 = sbr.rel (0) target = $region9
    $region8: #{strep_forward.1} parent=1 // pred_region
      %s35 = ssub.s32 16, 16
      %36 = vsyncadd [#allocation6], %s35
      %s38 = sshll.u32 %s1, 4
      %s39 = int_to_ptr.vmem [resolvable:$true] %s38
      %41 = dma.vmem_to_smem %s39, 16, [#allocation5], [#allocation6]
    $region9: #{strep_forward.1} parent=1 // pred_fallthru
      _
    // Predicated region
    $region10: #{strep_forward.1} parent=1 // pred_check
      _
    $region11: #{strep_forward.1} parent=1 // pred_check_branch
      %43 = sbr.rel (0) target = $region13
    $region12: #{strep_forward.1} parent=1 // pred_region
      _
    $region13: #{strep_forward.1} parent=1 // pred_fallthru
      _
    // Predicated region
    $region14: #{strep_forward.1} parent=1 // pred_check
      _
    $region15: #{strep_forward.1} parent=1 // pred_check_branch
      %45 = sbr.rel (0) target = $region17
    $region16: #{strep_forward.1} parent=1 // pred_region
      _
    $region17: #{strep_forward.1} parent=1 // pred_fallthru
      _
    // Predicated region
    $region18: #{strep_forward.1} parent=1 // pred_check
      _
    $region19: #{strep_forward.1} parent=1 // pred_check_branch
      %47 = sbr.rel (0) target = $region21
    $region20: #{strep_forward.1} parent=1 // pred_region
      _
    $region21: #{strep_forward.1} parent=1 // pred_fallthru
      _
    // Predicated region
    $region22: #{strep_forward.1} parent=1 // pred_check
      _
    $region23: #{strep_forward.1} parent=1 // pred_check_branch
      %49 = sbr.rel (0) target = $region25
    $region24: #{strep_forward.1} parent=1 // pred_region
      _
    $region25: #{strep_forward.1} parent=1 // pred_fallthru
      _
    // Predicated region
    $region26: #{strep_forward.1} parent=1 // pred_check
      _
    $region27: #{strep_forward.1} parent=1 // pred_check_branch
      %51 = sbr.rel (0) target = $region29
    $region28: #{strep_forward.1} parent=1 // pred_region
      _
    $region29: #{strep_forward.1} parent=1 // pred_fallthru
      _
    // Predicated region
    $region30: #{strep_forward.1} parent=1 // pred_check
      _
    $region31: #{strep_forward.1} parent=1 // pred_check_branch
      %53 = sbr.rel (0) target = $region33
    $region32: #{strep_forward.1} parent=1 // pred_region
      _
    $region33: #{strep_forward.1} parent=1 // pred_fallthru
      _
    // Predicated region
    $region34: #{strep_forward.1} parent=1 // pred_check
      _
    $region35: #{strep_forward.1} parent=1 // pred_check_branch
      %55 = sbr.rel (0) target = $region37
    $region36: #{strep_forward.1} parent=1 // pred_region
      _
    $region37: #{strep_forward.1} parent=1 // pred_fallthru
      _
    // Predicated region
    $region38: #{strep_forward.1} parent=1 // pred_check
      _
    $region39: #{strep_forward.1} parent=1 // pred_check_branch
      %57 = sbr.rel (0) target = $region41
    $region40: #{strep_forward.1} parent=1 // pred_region
      _
    $region41: #{strep_forward.1} parent=1 // pred_fallthru
      _
    // Predicated region
    $region42: #{strep_forward.1} parent=1 // pred_check
      _
    $region43: #{strep_forward.1} parent=1 // pred_check_branch
      %59 = sbr.rel (0) target = $region45
    $region44: #{strep_forward.1} parent=1 // pred_region
      _
    $region45: #{strep_forward.1} parent=1 // pred_fallthru
      _
    // Predicated region
    $region46: #{strep_forward.1} parent=1 // pred_check
      _
    $region47: #{strep_forward.1} parent=1 // pred_check_branch
      %61 = sbr.rel (0) target = $region49
    $region48: #{strep_forward.1} parent=1 // pred_region
      _
    $region49: #{strep_forward.1} parent=1 // pred_fallthru
      _
    // Predicated region
    $region50: #{strep_forward.1} parent=1 // pred_check
      _
    $region51: #{strep_forward.1} parent=1 // pred_check_branch
      %63 = sbr.rel (0) target = $region53
    $region52: #{strep_forward.1} parent=1 // pred_region
      %64 = dma.done [#allocation4], 16
    $region53: #{strep_forward.1} parent=1 // pred_fallthru
      _
    // Predicated region
    $region54: #{strep_forward.1} parent=1 // pred_check
      _
    $region55: #{strep_forward.1} parent=1 // pred_check_branch
      %66 = sbr.rel (0) target = $region57
    $region56: #{strep_forward.1} parent=1 // pred_region
      %67 = dma.done [#allocation6], 16
    $region57: #{strep_forward.1} parent=1 // pred_fallthru
      _
    %68 = sfence
    %v69 = vld [vmem:[%s2] sm:$0xff]
    %v70 = vld [vmem:[%s2 + $0x8] sm:$0xff]
    %v71 = vld [vmem:[%s2 + $0x10] sm:$0xff]
    %v72 = vld [vmem:[%s2 + $0x18] sm:$0xff]
    %v73 = vld [vmem:[%s2 + $0x20] sm:$0xff]
    %v74 = vld [vmem:[%s2 + $0x28] sm:$0xff]
    %v75 = vld [vmem:[%s3] sm:$0xff]
    %v76 = vld [vmem:[%s3 + $0x8] sm:$0xff]
    %v77 = vld [vmem:[%s11] sm:$0x1]
    %v78 = vld [vmem:[%s11 + $0x1] sm:$0x1]
    %v79 = vld [vmem:[%s11 + $0x2] sm:$0x1]
    %v80 = vld [vmem:[%s11 + $0x3] sm:$0x1]
    %v81 = vld [vmem:[%s11 + $0x4] sm:$0x1]
    %v82 = vld [vmem:[%s11 + $0x5] sm:$0x1]
    %v83 = vld [vmem:[%s5] sm:$0xff]
    %v84 = vld [vmem:[%s5 + $0x8] sm:$0xff]
    %v85 = vld [vmem:[%s5 + $0x10] sm:$0xff]
    %v86 = vld [vmem:[%s5 + $0x18] sm:$0xff]
    %v87 = vld [vmem:[%s5 + $0x20] sm:$0xff]
    %v88 = vld [vmem:[%s5 + $0x28] sm:$0xff]
    %v89 = vld [vmem:[%s5 + $0x30] sm:$0xff]
    %v90 = vld [vmem:[%s5 + $0x38] sm:$0xff]
    %v91 = vld [vmem:[%s5 + $0x40] sm:$0xff]
    %v92 = vld [vmem:[%s5 + $0x48] sm:$0xff]
    %v93 = vld [vmem:[%s5 + $0x50] sm:$0xff]
    %v94 = vld [vmem:[%s5 + $0x58] sm:$0xff]
    %v95 = vld [vmem:[%s5 + $0x60] sm:$0xff]
    %v96 = vld [vmem:[%s5 + $0x68] sm:$0xff]
    %v97 = vld [vmem:[%s5 + $0x70] sm:$0xff]
    %v98 = vld [vmem:[%s5 + $0x78] sm:$0xff]
    %v99 = vld [vmem:[%s5 + $0x80] sm:$0xff]
    %v100 = vld [vmem:[%s5 + $0x88] sm:$0xff]
    %v101 = vld [vmem:[%s5 + $0x90] sm:$0xff]
    %v102 = vld [vmem:[%s5 + $0x98] sm:$0xff]
    %v103 = vld [vmem:[%s5 + $0xa0] sm:$0xff]
    %v104 = vld [vmem:[%s5 + $0xa8] sm:$0xff]
    %v105 = vld [vmem:[%s5 + $0xb0] sm:$0xff]
    %v106 = vld [vmem:[%s5 + $0xb8] sm:$0xff]
    %v107 = vld [vmem:[%s5 + $0xc0] sm:$0xff]
    %v108 = vld [vmem:[%s5 + $0xc8] sm:$0xff]
    %v109 = vld [vmem:[%s5 + $0xd0] sm:$0xff]
    %v110 = vld [vmem:[%s5 + $0xd8] sm:$0xff]
    %v111 = vld [vmem:[%s5 + $0xe0] sm:$0xff]
    %v112 = vld [vmem:[%s5 + $0xe8] sm:$0xff]
    %v113 = vld [vmem:[%s5 + $0xf0] sm:$0xff]
    %v114 = vld [vmem:[%s5 + $0xf8] sm:$0xff]
    %v115 = vld [vmem:[%s5 + $0x100] sm:$0xff]
    %v116 = vld [vmem:[%s5 + $0x108] sm:$0xff]
    %v117 = vld [vmem:[%s5 + $0x110] sm:$0xff]
    %v118 = vld [vmem:[%s5 + $0x118] sm:$0xff]
    %vm119 = vcmask 261120
    %v121 = vsel %vm119, %v71, 0
    %v124 = vsel %vm119, %v74, 0
    %126 = vmatprep.subr.mxu0 0.0
    %127 = vmatpush1.msra.mxu0 %v83
    %128 = vmatprep.subr.mxu0 0.0
    %129 = vmatpush1.msra.mxu0 %v84
    %130 = vmatprep.subr.mxu0 0.0
    %131 = vmatpush1.msra.mxu0 %v85
    %132 = vmatprep.subr.mxu0 0.0
    %133 = vmatpush1.msra.mxu0 %v86
    %134 = vmatprep.subr.mxu0 0.0
    %135 = vmatpush1.msra.mxu0 %v87
    %136 = vmatprep.subr.mxu0 0.0
    %137 = vmatpush1.msra.mxu0 %v88
    %138 = vmatprep.subr.mxu0 0.0
    %139 = vmatpush1.msra.mxu0 %v89
    %140 = vmatprep.subr.mxu0 0.0
    %141 = vmatpush1.msra.mxu0 %v90
    %142 = vmatprep.subr.mxu0 0.0
    %143 = vmatpush1.msra.mxu0 %v91
    %144 = vmatprep.subr.mxu0 0.0
    %145 = vmatpush1.msra.mxu0 %v92
    %146 = vmatprep.subr.mxu0 0.0
    %147 = vmatpush1.msra.mxu0 %v93
    %148 = vmatprep.subr.mxu0 0.0
    %149 = vmatpush1.msra.mxu0 %v94
    %150 = vmatprep.subr.mxu0 0.0
    %151 = vmatpush1.msra.mxu0 %v95
    %152 = vmatprep.subr.mxu0 0.0
    %153 = vmatpush1.msra.mxu0 %v96
    %154 = vmatprep.subr.mxu0 0.0
    %155 = vmatpush1.msra.mxu0 %v97
    %156 = vmatprep.subr.mxu0 0.0
    %157 = vmatpush1.msra.mxu0 %v98
    %158 = vmatprep.subr.mxu0 0.0
    %159 = vmatpush1.msra.mxu0 %v99
    %160 = vmatprep.subr.mxu0 0.0
    %161 = vmatpush1.msra.mxu0 %v100
    %162 = vmatprep.subr.mxu0 0.0
    %163 = vmatpush1.msra.mxu0 %v101
    %164 = vmatprep.subr.mxu0 0.0
    %165 = vmatpush1.msra.mxu0 %v102
    %166 = vmatprep.subr.mxu0 0.0
    %167 = vmatpush1.msra.mxu0 %v103
    %168 = vmatprep.subr.mxu0 0.0
    %169 = vmatpush1.msra.mxu0 %v104
    %170 = vmatprep.subr.mxu0 0.0
    %171 = vmatpush1.msra.mxu0 %v105
    %172 = vmatprep.subr.mxu0 0.0
    %173 = vmatpush1.msra.mxu0 %v106
    %174 = vmatprep.subr.mxu0 0.0
    %175 = vmatpush1.msra.mxu0 %v107
    %176 = vmatprep.subr.mxu0 0.0
    %177 = vmatpush1.msra.mxu0 %v108
    %178 = vmatprep.subr.mxu0 0.0
    %179 = vmatpush1.msra.mxu0 %v109
    %180 = vmatprep.subr.mxu0 0.0
    %181 = vmatpush1.msra.mxu0 %v110
    %182 = vmatprep.subr.mxu0 0.0
    %183 = vmatpush1.msra.mxu0 %v111
    %184 = vmatprep.subr.mxu0 0.0
    %185 = vmatpush1.msra.mxu0 %v112
    %186 = vmatprep.subr.mxu0 0.0
    %187 = vmatpush1.msra.mxu0 %v113
    %188 = vmatprep.subr.mxu0 0.0
    %189 = vmatpush1.msra.mxu0 %v114
    %190 = vmatprep.mubr.f32.mxu0 %v70
    %191 = vmatmul.mubr.f32.gmra.mrb[0].mxu0 %v69
    %v192 = vpop.f32.mrb[0].mxu0
    %v193 = vadd.f32 0.0, %v192
    %v194 = vpop.f32.mrb[0].mxu0
    %195 = vmatprep.mubr.f32.mxu0 %v73
    %196 = vmatmul.mubr.f32.gmra.mrb[0].mxu0 %v72
    %v197 = vpop.f32.mrb[0].mxu0
    %v198 = vadd.f32 0.0, %v197
    %v199 = vpop.f32.mrb[0].mxu0
    %200 = vdwg.mxu0
    %201 = vmatprep.subr.mxu0 0.0
    %202 = vmatpush1.msra.mxu0 %v115
    %203 = vmatprep.subr.mxu0 0.0
    %204 = vmatpush1.msra.mxu0 %v116
    %205 = vmatprep.subr.mxu0 0.0
    %206 = vmatpush1.msra.mxu0 %v117
    %207 = vmatprep.subr.mxu0 0.0
    %208 = vmatpush1.msra.mxu0 %v118
    %209 = vmatprep.subr.mxu0 0.0
    %210 = vmatpush1.msra.mxu0 0.0
    %211 = vmatprep.subr.mxu0 0.0
    %212 = vmatpush1.msra.mxu0 0.0
    %213 = vmatprep.subr.mxu0 0.0
    %214 = vmatpush1.msra.mxu0 0.0
    %215 = vmatprep.subr.mxu0 0.0
    %216 = vmatpush1.msra.mxu0 0.0
    %217 = vmatprep.subr.mxu0 0.0
    %218 = vmatpush1.msra.mxu0 0.0
    %219 = vmatprep.subr.mxu0 0.0
    %220 = vmatpush1.msra.mxu0 0.0
    %221 = vmatprep.subr.mxu0 0.0
    %222 = vmatpush1.msra.mxu0 0.0
    %223 = vmatprep.subr.mxu0 0.0
    %224 = vmatpush1.msra.mxu0 0.0
    %225 = vmatprep.subr.mxu0 0.0
    %226 = vmatpush1.msra.mxu0 0.0
    %227 = vmatprep.subr.mxu0 0.0
    %228 = vmatpush1.msra.mxu0 0.0
    %229 = vmatprep.subr.mxu0 0.0
    %230 = vmatpush1.msra.mxu0 0.0
    %231 = vmatprep.subr.mxu0 0.0
    %232 = vmatpush1.msra.mxu0 0.0
    %233 = vmatprep.subr.mxu0 0.0
    %234 = vmatpush1.msra.mxu0 0.0
    %235 = vmatprep.subr.mxu0 0.0
    %236 = vmatpush1.msra.mxu0 0.0
    %237 = vmatprep.subr.mxu0 0.0
    %238 = vmatpush1.msra.mxu0 0.0
    %239 = vmatprep.subr.mxu0 0.0
    %240 = vmatpush1.msra.mxu0 0.0
    %241 = vmatprep.subr.mxu0 0.0
    %242 = vmatpush1.msra.mxu0 0.0
    %243 = vmatprep.subr.mxu0 0.0
    %244 = vmatpush1.msra.mxu0 0.0
    %245 = vmatprep.subr.mxu0 0.0
    %246 = vmatpush1.msra.mxu0 0.0
    %247 = vmatprep.subr.mxu0 0.0
    %248 = vmatpush1.msra.mxu0 0.0
    %249 = vmatprep.subr.mxu0 0.0
    %250 = vmatpush1.msra.mxu0 0.0
    %251 = vmatprep.subr.mxu0 0.0
    %252 = vmatpush1.msra.mxu0 0.0
    %253 = vmatprep.subr.mxu0 0.0
    %254 = vmatpush1.msra.mxu0 0.0
    %255 = vmatprep.subr.mxu0 0.0
    %256 = vmatpush1.msra.mxu0 0.0
    %257 = vmatprep.subr.mxu0 0.0
    %258 = vmatpush1.msra.mxu0 0.0
    %259 = vmatprep.subr.mxu0 0.0
    %260 = vmatpush1.msra.mxu0 0.0
    %261 = vmatprep.subr.mxu0 0.0
    %262 = vmatpush1.msra.mxu0 0.0
    %263 = vmatprep.subr.mxu0 0.0
    %264 = vmatpush1.msra.mxu0 0.0
    %265 = vmatprep.mubr.f32.mxu0 0.0
    %266 = vmatmul.mubr.f32.gmra.mrb[0].mxu0 %v121
    %v267 = vpop.f32.mrb[0].mxu0
    %v268 = vadd.f32 %v193, %v267
    %v269 = vpop.f32.mrb[0].mxu0
    %270 = vmatprep.mubr.f32.mxu0 0.0
    %271 = vmatmul.mubr.f32.gmra.mrb[0].mxu0 %v124
    %v272 = vpop.f32.mrb[0].mxu0
    %v273 = vadd.f32 %v198, %v272
    %v274 = vpop.f32.mrb[0].mxu0
    %275 = vdwg.mxu0
    %v276 = vlaneseq
    %v277 = vshrl.u32 %v276, 7
    %v278 = vsub.s32 0, %v277
    %v279 = vrot.slane %v77, %v278
    %v280 = vadd.f32 %v268, %v279
    %v281 = vadd.f32 %v273, %v279
    %v282 = vmax.f32 %v280, 0.0
    %v283 = vmax.f32 %v281, 0.0
    %v284 = vld [vmem:[%s7] sm:$0xff]
    %v285 = vld [vmem:[%s7 + $0x8] sm:$0xf]
    %vm286 = vcmask 97280
    %v288 = vsel %vm286, %v75, 0
    %v291 = vsel %vm286, %v76, 0
    %vm293 = vcmask 1043456
    %v295 = vsel %vm293, %v285, 0
    %297 = vmatprep.subr.mxu0 0.0
    %298 = vmatpush1.msra.mxu0 %v284
    %299 = vmatprep.subr.mxu0 0.0
    %300 = vmatpush1.msra.mxu0 %v295
    %301 = vmatprep.subr.mxu0 0.0
    %302 = vmatpush1.msra.mxu0 0.0
    %303 = vmatprep.subr.mxu0 0.0
    %304 = vmatpush1.msra.mxu0 0.0
    %305 = vmatprep.subr.mxu0 0.0
    %306 = vmatpush1.msra.mxu0 0.0
    %307 = vmatprep.subr.mxu0 0.0
    %308 = vmatpush1.msra.mxu0 0.0
    %309 = vmatprep.subr.mxu0 0.0
    %310 = vmatpush1.msra.mxu0 0.0
    %311 = vmatprep.subr.mxu0 0.0
    %312 = vmatpush1.msra.mxu0 0.0
    %313 = vmatprep.subr.mxu0 0.0
    %314 = vmatpush1.msra.mxu0 0.0
    %315 = vmatprep.subr.mxu0 0.0
    %316 = vmatpush1.msra.mxu0 0.0
    %317 = vmatprep.subr.mxu0 0.0
    %318 = vmatpush1.msra.mxu0 0.0
    %319 = vmatprep.subr.mxu0 0.0
    %320 = vmatpush1.msra.mxu0 0.0
    %321 = vmatprep.subr.mxu0 0.0
    %322 = vmatpush1.msra.mxu0 0.0
    %323 = vmatprep.subr.mxu0 0.0
    %324 = vmatpush1.msra.mxu0 0.0
    %325 = vmatprep.subr.mxu0 0.0
    %326 = vmatpush1.msra.mxu0 0.0
    %327 = vmatprep.subr.mxu0 0.0
    %328 = vmatpush1.msra.mxu0 0.0
    %329 = vmatprep.subr.mxu0 0.0
    %330 = vmatpush1.msra.mxu0 0.0
    %331 = vmatprep.subr.mxu0 0.0
    %332 = vmatpush1.msra.mxu0 0.0
    %333 = vmatprep.subr.mxu0 0.0
    %334 = vmatpush1.msra.mxu0 0.0
    %335 = vmatprep.subr.mxu0 0.0
    %336 = vmatpush1.msra.mxu0 0.0
    %337 = vmatprep.subr.mxu0 0.0
    %338 = vmatpush1.msra.mxu0 0.0
    %339 = vmatprep.subr.mxu0 0.0
    %340 = vmatpush1.msra.mxu0 0.0
    %341 = vmatprep.subr.mxu0 0.0
    %342 = vmatpush1.msra.mxu0 0.0
    %343 = vmatprep.subr.mxu0 0.0
    %344 = vmatpush1.msra.mxu0 0.0
    %345 = vmatprep.subr.mxu0 0.0
    %346 = vmatpush1.msra.mxu0 0.0
    %347 = vmatprep.subr.mxu0 0.0
    %348 = vmatpush1.msra.mxu0 0.0
    %349 = vmatprep.subr.mxu0 0.0
    %350 = vmatpush1.msra.mxu0 0.0
    %351 = vmatprep.subr.mxu0 0.0
    %352 = vmatpush1.msra.mxu0 0.0
    %353 = vmatprep.subr.mxu0 0.0
    %354 = vmatpush1.msra.mxu0 0.0
    %355 = vmatprep.subr.mxu0 0.0
    %356 = vmatpush1.msra.mxu0 0.0
    %357 = vmatprep.subr.mxu0 0.0
    %358 = vmatpush1.msra.mxu0 0.0
    %359 = vmatprep.subr.mxu0 0.0
    %360 = vmatpush1.msra.mxu0 0.0
    %361 = vmatprep.mubr.f32.mxu0 0.0
    %362 = vmatmul.mubr.f32.gmra.mrb[0].mxu0 %v288
    %v363 = vpop.f32.mrb[0].mxu0
    %v364 = vadd.f32 0.0, %v363
    %v365 = vpop.f32.mrb[0].mxu0
    %366 = vmatprep.mubr.f32.mxu0 0.0
    %367 = vmatmul.mubr.f32.gmra.mrb[0].mxu0 %v291
    %v368 = vpop.f32.mrb[0].mxu0
    %v369 = vadd.f32 0.0, %v368
    %v370 = vpop.f32.mrb[0].mxu0
    %371 = vdwg.mxu0
    %v372 = vld [vmem:[%s6] sm:$0xff]
    %v373 = vld [vmem:[%s6 + $0x8] sm:$0xff]
    %vm374 = vcmask 130048
    %v376 = vsel %vm374, %v282, 0
    %v379 = vsel %vm374, %v283, 0
    %381 = vmatprep.subr.mxu0 0.0
    %382 = vmatpush1.msra.mxu0 %v372
    %383 = vmatprep.subr.mxu0 0.0
    %384 = vmatpush1.msra.mxu0 %v373
    %385 = vmatprep.subr.mxu0 0.0
    %386 = vmatpush1.msra.mxu0 0.0
    %387 = vmatprep.subr.mxu0 0.0
    %388 = vmatpush1.msra.mxu0 0.0
    %389 = vmatprep.subr.mxu0 0.0
    %390 = vmatpush1.msra.mxu0 0.0
    %391 = vmatprep.subr.mxu0 0.0
    %392 = vmatpush1.msra.mxu0 0.0
    %393 = vmatprep.subr.mxu0 0.0
    %394 = vmatpush1.msra.mxu0 0.0
    %395 = vmatprep.subr.mxu0 0.0
    %396 = vmatpush1.msra.mxu0 0.0
    %397 = vmatprep.subr.mxu0 0.0
    %398 = vmatpush1.msra.mxu0 0.0
    %399 = vmatprep.subr.mxu0 0.0
    %400 = vmatpush1.msra.mxu0 0.0
    %401 = vmatprep.subr.mxu0 0.0
    %402 = vmatpush1.msra.mxu0 0.0
    %403 = vmatprep.subr.mxu0 0.0
    %404 = vmatpush1.msra.mxu0 0.0
    %405 = vmatprep.subr.mxu0 0.0
    %406 = vmatpush1.msra.mxu0 0.0
    %407 = vmatprep.subr.mxu0 0.0
    %408 = vmatpush1.msra.mxu0 0.0
    %409 = vmatprep.subr.mxu0 0.0
    %410 = vmatpush1.msra.mxu0 0.0
    %411 = vmatprep.subr.mxu0 0.0
    %412 = vmatpush1.msra.mxu0 0.0
    %413 = vmatprep.subr.mxu0 0.0
    %414 = vmatpush1.msra.mxu0 0.0
    %415 = vmatprep.subr.mxu0 0.0
    %416 = vmatpush1.msra.mxu0 0.0
    %417 = vmatprep.subr.mxu0 0.0
    %418 = vmatpush1.msra.mxu0 0.0
    %419 = vmatprep.subr.mxu0 0.0
    %420 = vmatpush1.msra.mxu0 0.0
    %421 = vmatprep.subr.mxu0 0.0
    %422 = vmatpush1.msra.mxu0 0.0
    %423 = vmatprep.subr.mxu0 0.0
    %424 = vmatpush1.msra.mxu0 0.0
    %425 = vmatprep.subr.mxu0 0.0
    %426 = vmatpush1.msra.mxu0 0.0
    %427 = vmatprep.subr.mxu0 0.0
    %428 = vmatpush1.msra.mxu0 0.0
    %429 = vmatprep.subr.mxu0 0.0
    %430 = vmatpush1.msra.mxu0 0.0
    %431 = vmatprep.subr.mxu0 0.0
    %432 = vmatpush1.msra.mxu0 0.0
    %433 = vmatprep.subr.mxu0 0.0
    %434 = vmatpush1.msra.mxu0 0.0
    %435 = vmatprep.subr.mxu0 0.0
    %436 = vmatpush1.msra.mxu0 0.0
    %437 = vmatprep.subr.mxu0 0.0
    %438 = vmatpush1.msra.mxu0 0.0
    %439 = vmatprep.subr.mxu0 0.0
    %440 = vmatpush1.msra.mxu0 0.0
    %441 = vmatprep.subr.mxu0 0.0
    %442 = vmatpush1.msra.mxu0 0.0
    %443 = vmatprep.subr.mxu0 0.0
    %444 = vmatpush1.msra.mxu0 0.0
    %445 = vmatprep.mubr.f32.mxu0 0.0
    %446 = vmatmul.mubr.f32.gmra.mrb[0].mxu0 %v376
    %v447 = vpop.f32.mrb[0].mxu0
    %v448 = vadd.f32 0.0, %v447
    %v449 = vpop.f32.mrb[0].mxu0
    %450 = vmatprep.mubr.f32.mxu0 0.0
    %451 = vmatmul.mubr.f32.gmra.mrb[0].mxu0 %v379
    %v452 = vpop.f32.mrb[0].mxu0
    %v453 = vadd.f32 0.0, %v452
    %v454 = vpop.f32.mrb[0].mxu0
    %455 = vdwg.mxu0
    %458 = vrot.lane.b32.xlu0 %v268, 112
    %v459 = vpop.permute.xlu0 %458
    %460 = vrot.lane.b32.xlu0 %v273, 112
    %v461 = vpop.permute.xlu0 %460
    %466 = vrot.lane.b32.xlu0 %v364, 16
    %v467 = vpop.permute.xlu0 %466
    %468 = vrot.lane.b32.xlu0 %v369, 16
    %v469 = vpop.permute.xlu0 %468
    %v472 = vsel %vm374, %v459, %v467
    %v473 = vsel %vm374, %v461, %v469
    %v475 = vsel %vm374, %v448, 0
    %477 = vmatprep.subr.mxu0 0.0
    %478 = vmatpush1.xpose.msra.mxu0 %v376
    %479 = vmatprep.subr.mxu0 0.0
    %480 = vmatpush1.xpose.msra.mxu0 0.0
    %481 = vmatprep.subr.mxu0 0.0
    %482 = vmatpush1.xpose.msra.mxu0 0.0
    %483 = vmatprep.subr.mxu0 0.0
    %484 = vmatpush1.xpose.msra.mxu0 0.0
    %485 = vmatprep.subr.mxu0 0.0
    %486 = vmatpush1.xpose.msra.mxu0 0.0
    %487 = vmatprep.subr.mxu0 0.0
    %488 = vmatpush1.xpose.msra.mxu0 0.0
    %489 = vmatprep.subr.mxu0 0.0
    %490 = vmatpush1.xpose.msra.mxu0 0.0
    %491 = vmatprep.subr.mxu0 0.0
    %492 = vmatpush1.xpose.msra.mxu0 0.0
    %493 = vmatprep.subr.mxu0 0.0
    %494 = vmatpush1.xpose.msra.mxu0 0.0
    %495 = vmatprep.subr.mxu0 0.0
    %496 = vmatpush1.xpose.msra.mxu0 0.0
    %497 = vmatprep.subr.mxu0 0.0
    %498 = vmatpush1.xpose.msra.mxu0 0.0
    %499 = vmatprep.subr.mxu0 0.0
    %500 = vmatpush1.xpose.msra.mxu0 0.0
    %501 = vmatprep.subr.mxu0 0.0
    %502 = vmatpush1.xpose.msra.mxu0 0.0
    %503 = vmatprep.subr.mxu0 0.0
    %504 = vmatpush1.xpose.msra.mxu0 0.0
    %505 = vmatprep.subr.mxu0 0.0
    %506 = vmatpush1.xpose.msra.mxu0 0.0
    %507 = vmatprep.subr.mxu0 0.0
    %508 = vmatpush1.xpose.msra.mxu0 0.0
    %509 = vmatprep.subr.mxu0 0.0
    %510 = vmatpush1.xpose.msra.mxu0 0.0
    %511 = vmatprep.subr.mxu0 0.0
    %512 = vmatpush1.xpose.msra.mxu0 0.0
    %513 = vmatprep.subr.mxu0 0.0
    %514 = vmatpush1.xpose.msra.mxu0 0.0
    %515 = vmatprep.subr.mxu0 0.0
    %516 = vmatpush1.xpose.msra.mxu0 0.0
    %517 = vmatprep.subr.mxu0 0.0
    %518 = vmatpush1.xpose.msra.mxu0 0.0
    %519 = vmatprep.subr.mxu0 0.0
    %520 = vmatpush1.xpose.msra.mxu0 0.0
    %521 = vmatprep.subr.mxu0 0.0
    %522 = vmatpush1.xpose.msra.mxu0 0.0
    %523 = vmatprep.subr.mxu0 0.0
    %524 = vmatpush1.xpose.msra.mxu0 0.0
    %525 = vmatprep.subr.mxu0 0.0
    %526 = vmatpush1.xpose.msra.mxu0 0.0
    %527 = vmatprep.subr.mxu0 0.0
    %528 = vmatpush1.xpose.msra.mxu0 0.0
    %529 = vmatprep.subr.mxu0 0.0
    %530 = vmatpush1.xpose.msra.mxu0 0.0
    %531 = vmatprep.subr.mxu0 0.0
    %532 = vmatpush1.xpose.msra.mxu0 0.0
    %533 = vmatprep.subr.mxu0 0.0
    %534 = vmatpush1.xpose.msra.mxu0 0.0
    %535 = vmatprep.subr.mxu0 0.0
    %536 = vmatpush1.xpose.msra.mxu0 0.0
    %537 = vmatprep.subr.mxu0 0.0
    %538 = vmatpush1.xpose.msra.mxu0 0.0
    %539 = vmatprep.subr.mxu0 0.0
    %540 = vmatpush1.xpose.msra.mxu0 0.0
    %541 = vmatprep.mubr.f32.mxu0 0.0
    %542 = vmatmul.mubr.f32.gmra.mrb[0].mxu0 %v475
    %v543 = vpop.f32.mrb[0].mxu0
    %v544 = vadd.f32 0.0, %v543
    %v545 = vpop.f32.mrb[0].mxu0
    %546 = vdwg.mxu0
    %v547 = vmax.f32 %v544, 0.0
    %vm548 = vcmask 64512
    %v549 = vsel %vm548, %v547, -inf
    %550 = vmax.xlane.f32.xlu0 %v549
    %v551 = vpop.xlane.xlu0 %550
    %v552 = vsub.f32 %v547, %v551
    %v553 = vmul.f32 %v552, 1.442695
    %v554 = vpow.pop %v553
    %v555 = vsel %vm548, %v554, 0.0
    %556 = vadd.xlane.f32.xlu0 %v555
    %v557 = vpop.xlane.xlu0 %556
    %v558 = vrcp.pop %v557
    %v559 = vmul.f32 %v554, %v558
    %v560 = vld [vmem:[%s4] sm:$0xff]
    %v561 = vadd.f32 %v559, %v560
    %v562 = vsel %vm548, %v561, -inf
    %563 = vmax.xlane.f32.xlu0 %v562
    %v564 = vpop.xlane.xlu0 %563
    %v565 = vsub.f32 %v561, %v564
    %v566 = vmul.f32 %v565, 1.442695
    %v567 = vpow.pop %v566
    %v568 = vsel %vm548, %v567, 0.0
    %569 = vadd.xlane.f32.xlu0 %v568
    %v570 = vpop.xlane.xlu0 %569
    %v571 = vrcp.pop %v570
    %v572 = vmul.f32 %v567, %v571
    %573 = vst.msk [vmem:[#allocation7] sm:$0xff] %vm548, %v572
    %v575 = vsel %vm548, %v572, 0
    %577 = vmatprep.subr.mxu0 0.0
    %578 = vmatpush1.msra.mxu0 %v472
    %579 = vmatprep.subr.mxu0 0.0
    %580 = vmatpush1.msra.mxu0 0.0
    %581 = vmatprep.subr.mxu0 0.0
    %582 = vmatpush1.msra.mxu0 0.0
    %583 = vmatprep.subr.mxu0 0.0
    %584 = vmatpush1.msra.mxu0 0.0
    %585 = vmatprep.subr.mxu0 0.0
    %586 = vmatpush1.msra.mxu0 0.0
    %587 = vmatprep.subr.mxu0 0.0
    %588 = vmatpush1.msra.mxu0 0.0
    %589 = vmatprep.subr.mxu0 0.0
    %590 = vmatpush1.msra.mxu0 0.0
    %591 = vmatprep.subr.mxu0 0.0
    %592 = vmatpush1.msra.mxu0 0.0
    %593 = vmatprep.subr.mxu0 0.0
    %594 = vmatpush1.msra.mxu0 0.0
    %595 = vmatprep.subr.mxu0 0.0
    %596 = vmatpush1.msra.mxu0 0.0
    %597 = vmatprep.subr.mxu0 0.0
    %598 = vmatpush1.msra.mxu0 0.0
    %599 = vmatprep.subr.mxu0 0.0
    %600 = vmatpush1.msra.mxu0 0.0
    %601 = vmatprep.subr.mxu0 0.0
    %602 = vmatpush1.msra.mxu0 0.0
    %603 = vmatprep.subr.mxu0 0.0
    %604 = vmatpush1.msra.mxu0 0.0
    %605 = vmatprep.subr.mxu0 0.0
    %606 = vmatpush1.msra.mxu0 0.0
    %607 = vmatprep.subr.mxu0 0.0
    %608 = vmatpush1.msra.mxu0 0.0
    %609 = vmatprep.subr.mxu0 0.0
    %610 = vmatpush1.msra.mxu0 0.0
    %611 = vmatprep.subr.mxu0 0.0
    %612 = vmatpush1.msra.mxu0 0.0
    %613 = vmatprep.subr.mxu0 0.0
    %614 = vmatpush1.msra.mxu0 0.0
    %615 = vmatprep.subr.mxu0 0.0
    %616 = vmatpush1.msra.mxu0 0.0
    %617 = vmatprep.subr.mxu0 0.0
    %618 = vmatpush1.msra.mxu0 0.0
    %619 = vmatprep.subr.mxu0 0.0
    %620 = vmatpush1.msra.mxu0 0.0
    %621 = vmatprep.subr.mxu0 0.0
    %622 = vmatpush1.msra.mxu0 0.0
    %623 = vmatprep.subr.mxu0 0.0
    %624 = vmatpush1.msra.mxu0 0.0
    %625 = vmatprep.subr.mxu0 0.0
    %626 = vmatpush1.msra.mxu0 0.0
    %627 = vmatprep.subr.mxu0 0.0
    %628 = vmatpush1.msra.mxu0 0.0
    %629 = vmatprep.subr.mxu0 0.0
    %630 = vmatpush1.msra.mxu0 0.0
    %631 = vmatprep.subr.mxu0 0.0
    %632 = vmatpush1.msra.mxu0 0.0
    %633 = vmatprep.subr.mxu0 0.0
    %634 = vmatpush1.msra.mxu0 0.0
    %635 = vmatprep.subr.mxu0 0.0
    %636 = vmatpush1.msra.mxu0 0.0
    %637 = vmatprep.subr.mxu0 0.0
    %638 = vmatpush1.msra.mxu0 0.0
    %639 = vmatprep.subr.mxu0 0.0
    %640 = vmatpush1.msra.mxu0 0.0
    %641 = vmatprep.mubr.f32.mxu0 0.0
    %642 = vmatmul.mubr.f32.gmra.mrb[0].mxu0 %v575
    %v643 = vpop.f32.mrb[0].mxu0
    %v644 = vadd.f32 0.0, %v643
    %v645 = vpop.f32.mrb[0].mxu0
    %646 = vdwg.mxu0
    %647 = vxpose.xlu0.b32.start [1/16] %v572, 128
    %648 = vxpose.xlu0.b32.cont [2/16] 0.0, 128
    %649 = vxpose.xlu0.b32.cont [3/16] 0.0, 128
    %650 = vxpose.xlu0.b32.cont [4/16] 0.0, 128
    %651 = vxpose.xlu0.b32.cont [5/16] 0.0, 128
    %652 = vxpose.xlu0.b32.cont [6/16] 0.0, 128
    %653 = vxpose.xlu0.b32.cont [7/16] 0.0, 128
    %654 = vxpose.xlu0.b32.cont [8/16] 0.0, 128
    %655 = vxpose.xlu0.b32.cont [9/16] 0.0, 128
    %656 = vxpose.xlu0.b32.cont [10/16] 0.0, 128
    %657 = vxpose.xlu0.b32.cont [11/16] 0.0, 128
    %658 = vxpose.xlu0.b32.cont [12/16] 0.0, 128
    %659 = vxpose.xlu0.b32.cont [13/16] 0.0, 128
    %660 = vxpose.xlu0.b32.cont [14/16] 0.0, 128
    %661 = vxpose.xlu0.b32.cont [15/16] 0.0, 128
    %662 = vxpose.xlu0.b32.end [16/16] 0.0, 128
    %v663 = vpop.trf.xlu0
    %v664 = vpop.trf.xlu0
    %v665 = vpop.trf.xlu0
    %v666 = vpop.trf.xlu0
    %v667 = vpop.trf.xlu0
    %v668 = vpop.trf.xlu0
    %v669 = vpop.trf.xlu0
    %v670 = vpop.trf.xlu0
    %v671 = vpop.trf.xlu0
    %v672 = vpop.trf.xlu0
    %v673 = vpop.trf.xlu0
    %v674 = vpop.trf.xlu0
    %v675 = vpop.trf.xlu0
    %v676 = vpop.trf.xlu0
    %v677 = vpop.trf.xlu0
    %v678 = vpop.trf.xlu0
    %679 = vrot.lane.b32.xlu0 %v364, 112
    %v680 = vpop.permute.xlu0 %679
    %v683 = vsel %vm548, %v663, 0
    %685 = vmatprep.subr.mxu0 0.0
    %686 = vmatpush1.msra.mxu0 %v680
    %687 = vmatprep.subr.mxu0 0.0
    %688 = vmatpush1.msra.mxu0 0.0
    %689 = vmatprep.subr.mxu0 0.0
    %690 = vmatpush1.msra.mxu0 0.0
    %691 = vmatprep.subr.mxu0 0.0
    %692 = vmatpush1.msra.mxu0 0.0
    %693 = vmatprep.subr.mxu0 0.0
    %694 = vmatpush1.msra.mxu0 0.0
    %695 = vmatprep.subr.mxu0 0.0
    %696 = vmatpush1.msra.mxu0 0.0
    %697 = vmatprep.subr.mxu0 0.0
    %698 = vmatpush1.msra.mxu0 0.0
    %699 = vmatprep.subr.mxu0 0.0
    %700 = vmatpush1.msra.mxu0 0.0
    %701 = vmatprep.subr.mxu0 0.0
    %702 = vmatpush1.msra.mxu0 0.0
    %703 = vmatprep.subr.mxu0 0.0
    %704 = vmatpush1.msra.mxu0 0.0
    %705 = vmatprep.subr.mxu0 0.0
    %706 = vmatpush1.msra.mxu0 0.0
    %707 = vmatprep.subr.mxu0 0.0
    %708 = vmatpush1.msra.mxu0 0.0
    %709 = vmatprep.subr.mxu0 0.0
    %710 = vmatpush1.msra.mxu0 0.0
    %711 = vmatprep.subr.mxu0 0.0
    %712 = vmatpush1.msra.mxu0 0.0
    %713 = vmatprep.subr.mxu0 0.0
    %714 = vmatpush1.msra.mxu0 0.0
    %715 = vmatprep.subr.mxu0 0.0
    %716 = vmatpush1.msra.mxu0 0.0
    %717 = vmatprep.subr.mxu0 0.0
    %718 = vmatpush1.msra.mxu0 0.0
    %719 = vmatprep.subr.mxu0 0.0
    %720 = vmatpush1.msra.mxu0 0.0
    %721 = vmatprep.subr.mxu0 0.0
    %722 = vmatpush1.msra.mxu0 0.0
    %723 = vmatprep.subr.mxu0 0.0
    %724 = vmatpush1.msra.mxu0 0.0
    %725 = vmatprep.subr.mxu0 0.0
    %726 = vmatpush1.msra.mxu0 0.0
    %727 = vmatprep.subr.mxu0 0.0
    %728 = vmatpush1.msra.mxu0 0.0
    %729 = vmatprep.subr.mxu0 0.0
    %730 = vmatpush1.msra.mxu0 0.0
    %731 = vmatprep.subr.mxu0 0.0
    %732 = vmatpush1.msra.mxu0 0.0
    %733 = vmatprep.subr.mxu0 0.0
    %734 = vmatpush1.msra.mxu0 0.0
    %735 = vmatprep.subr.mxu0 0.0
    %736 = vmatpush1.msra.mxu0 0.0
    %737 = vmatprep.subr.mxu0 0.0
    %738 = vmatpush1.msra.mxu0 0.0
    %739 = vmatprep.subr.mxu0 0.0
    %740 = vmatpush1.msra.mxu0 0.0
    %741 = vmatprep.subr.mxu0 0.0
    %742 = vmatpush1.msra.mxu0 0.0
    %743 = vmatprep.subr.mxu0 0.0
    %744 = vmatpush1.msra.mxu0 0.0
    %745 = vmatprep.subr.mxu0 0.0
    %746 = vmatpush1.msra.mxu0 0.0
    %747 = vmatprep.subr.mxu0 0.0
    %748 = vmatpush1.msra.mxu0 0.0
    %749 = vmatprep.mubr.f32.mxu0 0.0
    %750 = vmatmul.mubr.f32.gmra.mrb[0].mxu0 %v683
    %v751 = vpop.f32.mrb[0].mxu0
    %v752 = vadd.f32 0.0, %v751
    %v753 = vpop.f32.mrb[0].mxu0
    %754 = vdwg.mxu0
    %v755 = vlaneseq
    %v756 = vshrl.u32 %v755, 7
    %v757 = vsub.s32 0, %v756
    %v758 = vrot.slane %v78, %v757
    %v759 = vadd.f32 %v644, %v758
    %v760 = vmax.f32 %v759, 0.0
    %762 = vrot.lane.b32.xlu0 %v752, 16
    %v763 = vpop.permute.xlu0 %762
    %v765 = vadd.f32 %v644, %v763
    %v766 = vlaneseq
    %v767 = vshrl.u32 %v766, 7
    %v768 = vsub.s32 0, %v767
    %v769 = vrot.slane %v79, %v768
    %771 = vrot.lane.b32.xlu0 %v769, 16
    %v772 = vpop.permute.xlu0 %771
    %v774 = vadd.f32 %v765, %v772
    %v775 = vmax.f32 %v774, 0.0
    %v777 = vsel %vm374, %v453, 0
    %779 = vmatprep.subr.mxu0 0.0
    %780 = vmatpush1.xpose.msra.mxu0 %v379
    %781 = vmatprep.subr.mxu0 0.0
    %782 = vmatpush1.xpose.msra.mxu0 0.0
    %783 = vmatprep.subr.mxu0 0.0
    %784 = vmatpush1.xpose.msra.mxu0 0.0
    %785 = vmatprep.subr.mxu0 0.0
    %786 = vmatpush1.xpose.msra.mxu0 0.0
    %787 = vmatprep.subr.mxu0 0.0
    %788 = vmatpush1.xpose.msra.mxu0 0.0
    %789 = vmatprep.subr.mxu0 0.0
    %790 = vmatpush1.xpose.msra.mxu0 0.0
    %791 = vmatprep.subr.mxu0 0.0
    %792 = vmatpush1.xpose.msra.mxu0 0.0
    %793 = vmatprep.subr.mxu0 0.0
    %794 = vmatpush1.xpose.msra.mxu0 0.0
    %795 = vmatprep.subr.mxu0 0.0
    %796 = vmatpush1.xpose.msra.mxu0 0.0
    %797 = vmatprep.subr.mxu0 0.0
    %798 = vmatpush1.xpose.msra.mxu0 0.0
    %799 = vmatprep.subr.mxu0 0.0
    %800 = vmatpush1.xpose.msra.mxu0 0.0
    %801 = vmatprep.subr.mxu0 0.0
    %802 = vmatpush1.xpose.msra.mxu0 0.0
    %803 = vmatprep.subr.mxu0 0.0
    %804 = vmatpush1.xpose.msra.mxu0 0.0
    %805 = vmatprep.subr.mxu0 0.0
    %806 = vmatpush1.xpose.msra.mxu0 0.0
    %807 = vmatprep.subr.mxu0 0.0
    %808 = vmatpush1.xpose.msra.mxu0 0.0
    %809 = vmatprep.subr.mxu0 0.0
    %810 = vmatpush1.xpose.msra.mxu0 0.0
    %811 = vmatprep.subr.mxu0 0.0
    %812 = vmatpush1.xpose.msra.mxu0 0.0
    %813 = vmatprep.subr.mxu0 0.0
    %814 = vmatpush1.xpose.msra.mxu0 0.0
    %815 = vmatprep.subr.mxu0 0.0
    %816 = vmatpush1.xpose.msra.mxu0 0.0
    %817 = vmatprep.subr.mxu0 0.0
    %818 = vmatpush1.xpose.msra.mxu0 0.0
    %819 = vmatprep.subr.mxu0 0.0
    %820 = vmatpush1.xpose.msra.mxu0 0.0
    %821 = vmatprep.subr.mxu0 0.0
    %822 = vmatpush1.xpose.msra.mxu0 0.0
    %823 = vmatprep.subr.mxu0 0.0
    %824 = vmatpush1.xpose.msra.mxu0 0.0
    %825 = vmatprep.subr.mxu0 0.0
    %826 = vmatpush1.xpose.msra.mxu0 0.0
    %827 = vmatprep.subr.mxu0 0.0
    %828 = vmatpush1.xpose.msra.mxu0 0.0
    %829 = vmatprep.subr.mxu0 0.0
    %830 = vmatpush1.xpose.msra.mxu0 0.0
    %831 = vmatprep.subr.mxu0 0.0
    %832 = vmatpush1.xpose.msra.mxu0 0.0
    %833 = vmatprep.subr.mxu0 0.0
    %834 = vmatpush1.xpose.msra.mxu0 0.0
    %835 = vmatprep.subr.mxu0 0.0
    %836 = vmatpush1.xpose.msra.mxu0 0.0
    %837 = vmatprep.subr.mxu0 0.0
    %838 = vmatpush1.xpose.msra.mxu0 0.0
    %839 = vmatprep.subr.mxu0 0.0
    %840 = vmatpush1.xpose.msra.mxu0 0.0
    %841 = vmatprep.subr.mxu0 0.0
    %842 = vmatpush1.xpose.msra.mxu0 0.0
    %843 = vmatprep.mubr.f32.mxu0 0.0
    %844 = vmatmul.mubr.f32.gmra.mrb[0].mxu0 %v777
    %v845 = vpop.f32.mrb[0].mxu0
    %v846 = vadd.f32 0.0, %v845
    %v847 = vpop.f32.mrb[0].mxu0
    %848 = vdwg.mxu0
    %v849 = vmax.f32 %v846, 0.0
    %v850 = vsel %vm548, %v849, -inf
    %851 = vmax.xlane.f32.xlu0 %v850
    %v852 = vpop.xlane.xlu0 %851
    %v853 = vsub.f32 %v849, %v852
    %v854 = vmul.f32 %v853, 1.442695
    %v855 = vpow.pop %v854
    %v856 = vsel %vm548, %v855, 0.0
    %857 = vadd.xlane.f32.xlu0 %v856
    %v858 = vpop.xlane.xlu0 %857
    %v859 = vrcp.pop %v858
    %v860 = vmul.f32 %v855, %v859
    %s861 = scalar_lea.vmem %s4, 8
    %v862 = vld [vmem:[%s861] sm:$0xff]
    %v863 = vadd.f32 %v860, %v862
    %v864 = vsel %vm548, %v863, -inf
    %865 = vmax.xlane.f32.xlu0 %v864
    %v866 = vpop.xlane.xlu0 %865
    %v867 = vsub.f32 %v863, %v866
    %v868 = vmul.f32 %v867, 1.442695
    %v869 = vpow.pop %v868
    %v870 = vsel %vm548, %v869, 0.0
    %871 = vadd.xlane.f32.xlu0 %v870
    %v872 = vpop.xlane.xlu0 %871
    %v873 = vrcp.pop %v872
    %v874 = vmul.f32 %v869, %v873
    %s875 = scalar_lea.vmem [#allocation7], 8
    %876 = vst.msk [vmem:[%s875] sm:$0xff] %vm548, %v874
    %v878 = vsel %vm548, %v874, 0
    %880 = vmatprep.subr.mxu0 0.0
    %881 = vmatpush1.msra.mxu0 %v473
    %882 = vmatprep.subr.mxu0 0.0
    %883 = vmatpush1.msra.mxu0 0.0
    %884 = vmatprep.subr.mxu0 0.0
    %885 = vmatpush1.msra.mxu0 0.0
    %886 = vmatprep.subr.mxu0 0.0
    %887 = vmatpush1.msra.mxu0 0.0
    %888 = vmatprep.subr.mxu0 0.0
    %889 = vmatpush1.msra.mxu0 0.0
    %890 = vmatprep.subr.mxu0 0.0
    %891 = vmatpush1.msra.mxu0 0.0
    %892 = vmatprep.subr.mxu0 0.0
    %893 = vmatpush1.msra.mxu0 0.0
    %894 = vmatprep.subr.mxu0 0.0
    %895 = vmatpush1.msra.mxu0 0.0
    %896 = vmatprep.subr.mxu0 0.0
    %897 = vmatpush1.msra.mxu0 0.0
    %898 = vmatprep.subr.mxu0 0.0
    %899 = vmatpush1.msra.mxu0 0.0
    %900 = vmatprep.subr.mxu0 0.0
    %901 = vmatpush1.msra.mxu0 0.0
    %902 = vmatprep.subr.mxu0 0.0
    %903 = vmatpush1.msra.mxu0 0.0
    %904 = vmatprep.subr.mxu0 0.0
    %905 = vmatpush1.msra.mxu0 0.0
    %906 = vmatprep.subr.mxu0 0.0
    %907 = vmatpush1.msra.mxu0 0.0
    %908 = vmatprep.subr.mxu0 0.0
    %909 = vmatpush1.msra.mxu0 0.0
    %910 = vmatprep.subr.mxu0 0.0
    %911 = vmatpush1.msra.mxu0 0.0
    %912 = vmatprep.subr.mxu0 0.0
    %913 = vmatpush1.msra.mxu0 0.0
    %914 = vmatprep.subr.mxu0 0.0
    %915 = vmatpush1.msra.mxu0 0.0
    %916 = vmatprep.subr.mxu0 0.0
    %917 = vmatpush1.msra.mxu0 0.0
    %918 = vmatprep.subr.mxu0 0.0
    %919 = vmatpush1.msra.mxu0 0.0
    %920 = vmatprep.subr.mxu0 0.0
    %921 = vmatpush1.msra.mxu0 0.0
    %922 = vmatprep.subr.mxu0 0.0
    %923 = vmatpush1.msra.mxu0 0.0
    %924 = vmatprep.subr.mxu0 0.0
    %925 = vmatpush1.msra.mxu0 0.0
    %926 = vmatprep.subr.mxu0 0.0
    %927 = vmatpush1.msra.mxu0 0.0
    %928 = vmatprep.subr.mxu0 0.0
    %929 = vmatpush1.msra.mxu0 0.0
    %930 = vmatprep.subr.mxu0 0.0
    %931 = vmatpush1.msra.mxu0 0.0
    %932 = vmatprep.subr.mxu0 0.0
    %933 = vmatpush1.msra.mxu0 0.0
    %934 = vmatprep.subr.mxu0 0.0
    %935 = vmatpush1.msra.mxu0 0.0
    %936 = vmatprep.subr.mxu0 0.0
    %937 = vmatpush1.msra.mxu0 0.0
    %938 = vmatprep.subr.mxu0 0.0
    %939 = vmatpush1.msra.mxu0 0.0
    %940 = vmatprep.subr.mxu0 0.0
    %941 = vmatpush1.msra.mxu0 0.0
    %942 = vmatprep.subr.mxu0 0.0
    %943 = vmatpush1.msra.mxu0 0.0
    %944 = vmatprep.mubr.f32.mxu0 0.0
    %945 = vmatmul.mubr.f32.gmra.mrb[0].mxu0 %v878
    %v946 = vpop.f32.mrb[0].mxu0
    %v947 = vadd.f32 0.0, %v946
    %v948 = vpop.f32.mrb[0].mxu0
    %949 = vdwg.mxu0
    %950 = vxpose.xlu0.b32.start [1/16] %v874, 128
    %951 = vxpose.xlu0.b32.cont [2/16] 0.0, 128
    %952 = vxpose.xlu0.b32.cont [3/16] 0.0, 128
    %953 = vxpose.xlu0.b32.cont [4/16] 0.0, 128
    %954 = vxpose.xlu0.b32.cont [5/16] 0.0, 128
    %955 = vxpose.xlu0.b32.cont [6/16] 0.0, 128
    %956 = vxpose.xlu0.b32.cont [7/16] 0.0, 128
    %957 = vxpose.xlu0.b32.cont [8/16] 0.0, 128
    %958 = vxpose.xlu0.b32.cont [9/16] 0.0, 128
    %959 = vxpose.xlu0.b32.cont [10/16] 0.0, 128
    %960 = vxpose.xlu0.b32.cont [11/16] 0.0, 128
    %961 = vxpose.xlu0.b32.cont [12/16] 0.0, 128
    %962 = vxpose.xlu0.b32.cont [13/16] 0.0, 128
    %963 = vxpose.xlu0.b32.cont [14/16] 0.0, 128
    %964 = vxpose.xlu0.b32.cont [15/16] 0.0, 128
    %965 = vxpose.xlu0.b32.end [16/16] 0.0, 128
    %v966 = vpop.trf.xlu0
    %v967 = vpop.trf.xlu0
    %v968 = vpop.trf.xlu0
    %v969 = vpop.trf.xlu0
    %v970 = vpop.trf.xlu0
    %v971 = vpop.trf.xlu0
    %v972 = vpop.trf.xlu0
    %v973 = vpop.trf.xlu0
    %v974 = vpop.trf.xlu0
    %v975 = vpop.trf.xlu0
    %v976 = vpop.trf.xlu0
    %v977 = vpop.trf.xlu0
    %v978 = vpop.trf.xlu0
    %v979 = vpop.trf.xlu0
    %v980 = vpop.trf.xlu0
    %v981 = vpop.trf.xlu0
    %982 = vrot.lane.b32.xlu0 %v369, 112
    %v983 = vpop.permute.xlu0 %982
    %v986 = vsel %vm548, %v966, 0
    %988 = vmatprep.subr.mxu0 0.0
    %989 = vmatpush1.msra.mxu0 %v983
    %990 = vmatprep.subr.mxu0 0.0
    %991 = vmatpush1.msra.mxu0 0.0
    %992 = vmatprep.subr.mxu0 0.0
    %993 = vmatpush1.msra.mxu0 0.0
    %994 = vmatprep.subr.mxu0 0.0
    %995 = vmatpush1.msra.mxu0 0.0
    %996 = vmatprep.subr.mxu0 0.0
    %997 = vmatpush1.msra.mxu0 0.0
    %998 = vmatprep.subr.mxu0 0.0
    %999 = vmatpush1.msra.mxu0 0.0
    %1000 = vmatprep.subr.mxu0 0.0
    %1001 = vmatpush1.msra.mxu0 0.0
    %1002 = vmatprep.subr.mxu0 0.0
    %1003 = vmatpush1.msra.mxu0 0.0
    %1004 = vmatprep.subr.mxu0 0.0
    %1005 = vmatpush1.msra.mxu0 0.0
    %1006 = vmatprep.subr.mxu0 0.0
    %1007 = vmatpush1.msra.mxu0 0.0
    %1008 = vmatprep.subr.mxu0 0.0
    %1009 = vmatpush1.msra.mxu0 0.0
    %1010 = vmatprep.subr.mxu0 0.0
    %1011 = vmatpush1.msra.mxu0 0.0
    %1012 = vmatprep.subr.mxu0 0.0
    %1013 = vmatpush1.msra.mxu0 0.0
    %1014 = vmatprep.subr.mxu0 0.0
    %1015 = vmatpush1.msra.mxu0 0.0
    %1016 = vmatprep.subr.mxu0 0.0
    %1017 = vmatpush1.msra.mxu0 0.0
    %1018 = vmatprep.subr.mxu0 0.0
    %1019 = vmatpush1.msra.mxu0 0.0
    %1020 = vmatprep.subr.mxu0 0.0
    %1021 = vmatpush1.msra.mxu0 0.0
    %1022 = vmatprep.subr.mxu0 0.0
    %1023 = vmatpush1.msra.mxu0 0.0
    %1024 = vmatprep.subr.mxu0 0.0
    %1025 = vmatpush1.msra.mxu0 0.0
    %1026 = vmatprep.subr.mxu0 0.0
    %1027 = vmatpush1.msra.mxu0 0.0
    %1028 = vmatprep.subr.mxu0 0.0
    %1029 = vmatpush1.msra.mxu0 0.0
    %1030 = vmatprep.subr.mxu0 0.0
    %1031 = vmatpush1.msra.mxu0 0.0
    %1032 = vmatprep.subr.mxu0 0.0
    %1033 = vmatpush1.msra.mxu0 0.0
    %1034 = vmatprep.subr.mxu0 0.0
    %1035 = vmatpush1.msra.mxu0 0.0
    %1036 = vmatprep.subr.mxu0 0.0
    %1037 = vmatpush1.msra.mxu0 0.0
    %1038 = vmatprep.subr.mxu0 0.0
    %1039 = vmatpush1.msra.mxu0 0.0
    %1040 = vmatprep.subr.mxu0 0.0
    %1041 = vmatpush1.msra.mxu0 0.0
    %1042 = vmatprep.subr.mxu0 0.0
    %1043 = vmatpush1.msra.mxu0 0.0
    %1044 = vmatprep.subr.mxu0 0.0
    %1045 = vmatpush1.msra.mxu0 0.0
    %1046 = vmatprep.subr.mxu0 0.0
    %1047 = vmatpush1.msra.mxu0 0.0
    %1048 = vmatprep.subr.mxu0 0.0
    %1049 = vmatpush1.msra.mxu0 0.0
    %1050 = vmatprep.subr.mxu0 0.0
    %1051 = vmatpush1.msra.mxu0 0.0
    %1052 = vmatprep.mubr.f32.mxu0 0.0
    %1053 = vmatmul.mubr.f32.gmra.mrb[0].mxu0 %v986
    %v1054 = vpop.f32.mrb[0].mxu0
    %v1055 = vadd.f32 0.0, %v1054
    %v1056 = vpop.f32.mrb[0].mxu0
    %1057 = vdwg.mxu0
    %v1058 = vadd.f32 %v947, %v758
    %v1059 = vmax.f32 %v1058, 0.0
    %1061 = vrot.lane.b32.xlu0 %v1055, 16
    %v1062 = vpop.permute.xlu0 %1061
    %v1064 = vadd.f32 %v947, %v1062
    %v1065 = vadd.f32 %v1064, %v772
    %v1066 = vmax.f32 %v1065, 0.0
    %1069 = vrot.lane.b32.xlu0 %v775, 112
    %v1070 = vpop.permute.xlu0 %1069
    %1071 = vrot.lane.b32.xlu0 %v1066, 112
    %v1072 = vpop.permute.xlu0 %1071
    %1075 = vrot.lane.b32.xlu0 %v282, 16
    %v1076 = vpop.permute.xlu0 %1075
    %1077 = vrot.lane.b32.xlu0 %v283, 16
    %v1078 = vpop.permute.xlu0 %1077
    %1083 = vrot.lane.b32.xlu0 %v760, 32
    %v1084 = vpop.permute.xlu0 %1083
    %1085 = vrot.lane.b32.xlu0 %v1059, 32
    %v1086 = vpop.permute.xlu0 %1085
    %v1089 = vsel %vm374, %v1070, %v1076
    %v1090 = vsel %vm374, %v1072, %v1078
    %v1091 = vsel %vm119, %v1089, %v1084
    %v1092 = vsel %vm119, %v1090, %v1086
    %v1093 = vld [vmem:[%s8] sm:$0xff]
    %v1094 = vld [vmem:[%s8 + $0x8] sm:$0xff]
    %v1095 = vld [vmem:[%s8 + $0x10] sm:$0xff]
    %v1096 = vld [vmem:[%s8 + $0x18] sm:$0xff]
    %v1097 = vld [vmem:[%s8 + $0x20] sm:$0xff]
    %v1098 = vld [vmem:[%s8 + $0x28] sm:$0xff]
    %v1099 = vlaneseq
    %v1100 = vshrl.u32 %v1099, 7
    %v1101 = vsub.s32 0, %v1100
    %v1102 = vrot.slane %v80, %v1101
    %vm1103 = vcmask 392192
    %v1105 = vsel %vm1103, %v1091, 0
    %v1108 = vsel %vm1103, %v1092, 0
    %1110 = vmatprep.subr.mxu0 0.0
    %1111 = vmatpush1.msra.mxu0 %v1093
    %1112 = vmatprep.subr.mxu0 0.0
    %1113 = vmatpush1.msra.mxu0 %v1094
    %1114 = vmatprep.subr.mxu0 0.0
    %1115 = vmatpush1.msra.mxu0 %v1095
    %1116 = vmatprep.subr.mxu0 0.0
    %1117 = vmatpush1.msra.mxu0 %v1096
    %1118 = vmatprep.subr.mxu0 0.0
    %1119 = vmatpush1.msra.mxu0 %v1097
    %1120 = vmatprep.subr.mxu0 0.0
    %1121 = vmatpush1.msra.mxu0 %v1098
    %1122 = vmatprep.subr.mxu0 0.0
    %1123 = vmatpush1.msra.mxu0 0.0
    %1124 = vmatprep.subr.mxu0 0.0
    %1125 = vmatpush1.msra.mxu0 0.0
    %1126 = vmatprep.subr.mxu0 0.0
    %1127 = vmatpush1.msra.mxu0 0.0
    %1128 = vmatprep.subr.mxu0 0.0
    %1129 = vmatpush1.msra.mxu0 0.0
    %1130 = vmatprep.subr.mxu0 0.0
    %1131 = vmatpush1.msra.mxu0 0.0
    %1132 = vmatprep.subr.mxu0 0.0
    %1133 = vmatpush1.msra.mxu0 0.0
    %1134 = vmatprep.subr.mxu0 0.0
    %1135 = vmatpush1.msra.mxu0 0.0
    %1136 = vmatprep.subr.mxu0 0.0
    %1137 = vmatpush1.msra.mxu0 0.0
    %1138 = vmatprep.subr.mxu0 0.0
    %1139 = vmatpush1.msra.mxu0 0.0
    %1140 = vmatprep.subr.mxu0 0.0
    %1141 = vmatpush1.msra.mxu0 0.0
    %1142 = vmatprep.subr.mxu0 0.0
    %1143 = vmatpush1.msra.mxu0 0.0
    %1144 = vmatprep.subr.mxu0 0.0
    %1145 = vmatpush1.msra.mxu0 0.0
    %1146 = vmatprep.subr.mxu0 0.0
    %1147 = vmatpush1.msra.mxu0 0.0
    %1148 = vmatprep.subr.mxu0 0.0
    %1149 = vmatpush1.msra.mxu0 0.0
    %1150 = vmatprep.subr.mxu0 0.0
    %1151 = vmatpush1.msra.mxu0 0.0
    %1152 = vmatprep.subr.mxu0 0.0
    %1153 = vmatpush1.msra.mxu0 0.0
    %1154 = vmatprep.subr.mxu0 0.0
    %1155 = vmatpush1.msra.mxu0 0.0
    %1156 = vmatprep.subr.mxu0 0.0
    %1157 = vmatpush1.msra.mxu0 0.0
    %1158 = vmatprep.subr.mxu0 0.0
    %1159 = vmatpush1.msra.mxu0 0.0
    %1160 = vmatprep.subr.mxu0 0.0
    %1161 = vmatpush1.msra.mxu0 0.0
    %1162 = vmatprep.subr.mxu0 0.0
    %1163 = vmatpush1.msra.mxu0 0.0
    %1164 = vmatprep.subr.mxu0 0.0
    %1165 = vmatpush1.msra.mxu0 0.0
    %1166 = vmatprep.subr.mxu0 0.0
    %1167 = vmatpush1.msra.mxu0 0.0
    %1168 = vmatprep.subr.mxu0 0.0
    %1169 = vmatpush1.msra.mxu0 0.0
    %1170 = vmatprep.subr.mxu0 0.0
    %1171 = vmatpush1.msra.mxu0 0.0
    %1172 = vmatprep.subr.mxu0 0.0
    %1173 = vmatpush1.msra.mxu0 0.0
    %1174 = vmatprep.mubr.f32.mxu0 0.0
    %1175 = vmatmul.mubr.f32.gmra.mrb[0].mxu0 %v1105
    %v1176 = vpop.f32.mrb[0].mxu0
    %v1177 = vadd.f32 %v1102, %v1176
    %v1178 = vpop.f32.mrb[0].mxu0
    %1179 = vmatprep.mubr.f32.mxu0 0.0
    %1180 = vmatmul.mubr.f32.gmra.mrb[0].mxu0 %v1108
    %v1181 = vpop.f32.mrb[0].mxu0
    %v1182 = vadd.f32 %v1102, %v1181
    %v1183 = vpop.f32.mrb[0].mxu0
    %1184 = vdwg.mxu0
    %v1185 = vmax.f32 %v1177, 0.0
    %v1186 = vmax.f32 %v1182, 0.0
    %v1187 = vld [vmem:[%s9] sm:$0xff]
    %v1188 = vld [vmem:[%s9 + $0x8] sm:$0xff]
    %v1189 = vld [vmem:[%s9 + $0x10] sm:$0xff]
    %v1190 = vld [vmem:[%s9 + $0x18] sm:$0xff]
    %v1191 = vld [vmem:[%s9 + $0x20] sm:$0xff]
    %v1192 = vld [vmem:[%s9 + $0x28] sm:$0xff]
    %v1193 = vld [vmem:[%s9 + $0x30] sm:$0xff]
    %v1194 = vld [vmem:[%s9 + $0x38] sm:$0xff]
    %v1195 = vld [vmem:[%s9 + $0x40] sm:$0xff]
    %v1196 = vld [vmem:[%s9 + $0x48] sm:$0xff]
    %v1197 = vld [vmem:[%s9 + $0x50] sm:$0xff]
    %v1198 = vld [vmem:[%s9 + $0x58] sm:$0xff]
    %v1199 = vlaneseq
    %v1200 = vshrl.u32 %v1199, 7
    %v1201 = vsub.s32 0, %v1200
    %v1202 = vrot.slane %v81, %v1201
    %vm1203 = vcmask 785408
    %v1205 = vsel %vm1203, %v1185, 0
    %v1208 = vsel %vm1203, %v1186, 0
    %1210 = vmatprep.subr.mxu0 0.0
    %1211 = vmatpush1.msra.mxu0 %v1187
    %1212 = vmatprep.subr.mxu0 0.0
    %1213 = vmatpush1.msra.mxu0 %v1188
    %1214 = vmatprep.subr.mxu0 0.0
    %1215 = vmatpush1.msra.mxu0 %v1189
    %1216 = vmatprep.subr.mxu0 0.0
    %1217 = vmatpush1.msra.mxu0 %v1190
    %1218 = vmatprep.subr.mxu0 0.0
    %1219 = vmatpush1.msra.mxu0 %v1191
    %1220 = vmatprep.subr.mxu0 0.0
    %1221 = vmatpush1.msra.mxu0 %v1192
    %1222 = vmatprep.subr.mxu0 0.0
    %1223 = vmatpush1.msra.mxu0 %v1193
    %1224 = vmatprep.subr.mxu0 0.0
    %1225 = vmatpush1.msra.mxu0 %v1194
    %1226 = vmatprep.subr.mxu0 0.0
    %1227 = vmatpush1.msra.mxu0 %v1195
    %1228 = vmatprep.subr.mxu0 0.0
    %1229 = vmatpush1.msra.mxu0 %v1196
    %1230 = vmatprep.subr.mxu0 0.0
    %1231 = vmatpush1.msra.mxu0 %v1197
    %1232 = vmatprep.subr.mxu0 0.0
    %1233 = vmatpush1.msra.mxu0 %v1198
    %1234 = vmatprep.subr.mxu0 0.0
    %1235 = vmatpush1.msra.mxu0 0.0
    %1236 = vmatprep.subr.mxu0 0.0
    %1237 = vmatpush1.msra.mxu0 0.0
    %1238 = vmatprep.subr.mxu0 0.0
    %1239 = vmatpush1.msra.mxu0 0.0
    %1240 = vmatprep.subr.mxu0 0.0
    %1241 = vmatpush1.msra.mxu0 0.0
    %1242 = vmatprep.subr.mxu0 0.0
    %1243 = vmatpush1.msra.mxu0 0.0
    %1244 = vmatprep.subr.mxu0 0.0
    %1245 = vmatpush1.msra.mxu0 0.0
    %1246 = vmatprep.subr.mxu0 0.0
    %1247 = vmatpush1.msra.mxu0 0.0
    %1248 = vmatprep.subr.mxu0 0.0
    %1249 = vmatpush1.msra.mxu0 0.0
    %1250 = vmatprep.subr.mxu0 0.0
    %1251 = vmatpush1.msra.mxu0 0.0
    %1252 = vmatprep.subr.mxu0 0.0
    %1253 = vmatpush1.msra.mxu0 0.0
    %1254 = vmatprep.subr.mxu0 0.0
    %1255 = vmatpush1.msra.mxu0 0.0
    %1256 = vmatprep.subr.mxu0 0.0
    %1257 = vmatpush1.msra.mxu0 0.0
    %1258 = vmatprep.subr.mxu0 0.0
    %1259 = vmatpush1.msra.mxu0 0.0
    %1260 = vmatprep.subr.mxu0 0.0
    %1261 = vmatpush1.msra.mxu0 0.0
    %1262 = vmatprep.subr.mxu0 0.0
    %1263 = vmatpush1.msra.mxu0 0.0
    %1264 = vmatprep.subr.mxu0 0.0
    %1265 = vmatpush1.msra.mxu0 0.0
    %1266 = vmatprep.subr.mxu0 0.0
    %1267 = vmatpush1.msra.mxu0 0.0
    %1268 = vmatprep.subr.mxu0 0.0
    %1269 = vmatpush1.msra.mxu0 0.0
    %1270 = vmatprep.subr.mxu0 0.0
    %1271 = vmatpush1.msra.mxu0 0.0
    %1272 = vmatprep.subr.mxu0 0.0
    %1273 = vmatpush1.msra.mxu0 0.0
    %1274 = vmatprep.mubr.f32.mxu0 0.0
    %1275 = vmatmul.mubr.f32.gmra.mrb[0].mxu0 %v1205
    %v1276 = vpop.f32.mrb[0].mxu0
    %v1277 = vadd.f32 %v1202, %v1276
    %v1278 = vpop.f32.mrb[0].mxu0
    %1279 = vmatprep.mubr.f32.mxu0 0.0
    %1280 = vmatmul.mubr.f32.gmra.mrb[0].mxu0 %v1208
    %v1281 = vpop.f32.mrb[0].mxu0
    %v1282 = vadd.f32 %v1202, %v1281
    %v1283 = vpop.f32.mrb[0].mxu0
    %1284 = vdwg.mxu0
    %v1285 = vmax.f32 %v1277, 0.0
    %v1286 = vmax.f32 %v1282, 0.0
    %v1287 = vadd.f32 %v1185, %v1285
    %v1288 = vadd.f32 %v1186, %v1286
    %v1289 = vld [vmem:[%s10] sm:$0xff]
    %v1290 = vld [vmem:[%s10 + $0x8] sm:$0xff]
    %v1291 = vld [vmem:[%s10 + $0x10] sm:$0xff]
    %v1292 = vld [vmem:[%s10 + $0x18] sm:$0xff]
    %v1293 = vld [vmem:[%s10 + $0x20] sm:$0xff]
    %v1294 = vld [vmem:[%s10 + $0x28] sm:$0xff]
    %v1295 = vld [vmem:[%s10 + $0x30] sm:$0xff]
    %v1296 = vld [vmem:[%s10 + $0x38] sm:$0xff]
    %v1297 = vld [vmem:[%s10 + $0x40] sm:$0xff]
    %v1298 = vld [vmem:[%s10 + $0x48] sm:$0xff]
    %v1299 = vld [vmem:[%s10 + $0x50] sm:$0xff]
    %v1300 = vld [vmem:[%s10 + $0x58] sm:$0xff]
    %v1301 = vlaneseq
    %v1302 = vshrl.u32 %v1301, 7
    %v1303 = vsub.s32 0, %v1302
    %v1304 = vrot.slane %v82, %v1303
    %v1306 = vsel %vm1203, %v1287, 0
    %v1309 = vsel %vm1203, %v1288, 0
    %1311 = vmatprep.subr.mxu0 0.0
    %1312 = vmatpush1.msra.mxu0 %v1289
    %1313 = vmatprep.subr.mxu0 0.0
    %1314 = vmatpush1.msra.mxu0 %v1290
    %1315 = vmatprep.subr.mxu0 0.0
    %1316 = vmatpush1.msra.mxu0 %v1291
    %1317 = vmatprep.subr.mxu0 0.0
    %1318 = vmatpush1.msra.mxu0 %v1292
    %1319 = vmatprep.subr.mxu0 0.0
    %1320 = vmatpush1.msra.mxu0 %v1293
    %1321 = vmatprep.subr.mxu0 0.0
    %1322 = vmatpush1.msra.mxu0 %v1294
    %1323 = vmatprep.subr.mxu0 0.0
    %1324 = vmatpush1.msra.mxu0 %v1295
    %1325 = vmatprep.subr.mxu0 0.0
    %1326 = vmatpush1.msra.mxu0 %v1296
    %1327 = vmatprep.subr.mxu0 0.0
    %1328 = vmatpush1.msra.mxu0 %v1297
    %1329 = vmatprep.subr.mxu0 0.0
    %1330 = vmatpush1.msra.mxu0 %v1298
    %1331 = vmatprep.subr.mxu0 0.0
    %1332 = vmatpush1.msra.mxu0 %v1299
    %1333 = vmatprep.subr.mxu0 0.0
    %1334 = vmatpush1.msra.mxu0 %v1300
    %1335 = vmatprep.subr.mxu0 0.0
    %1336 = vmatpush1.msra.mxu0 0.0
    %1337 = vmatprep.subr.mxu0 0.0
    %1338 = vmatpush1.msra.mxu0 0.0
    %1339 = vmatprep.subr.mxu0 0.0
    %1340 = vmatpush1.msra.mxu0 0.0
    %1341 = vmatprep.subr.mxu0 0.0
    %1342 = vmatpush1.msra.mxu0 0.0
    %1343 = vmatprep.subr.mxu0 0.0
    %1344 = vmatpush1.msra.mxu0 0.0
    %1345 = vmatprep.subr.mxu0 0.0
    %1346 = vmatpush1.msra.mxu0 0.0
    %1347 = vmatprep.subr.mxu0 0.0
    %1348 = vmatpush1.msra.mxu0 0.0
    %1349 = vmatprep.subr.mxu0 0.0
    %1350 = vmatpush1.msra.mxu0 0.0
    %1351 = vmatprep.subr.mxu0 0.0
    %1352 = vmatpush1.msra.mxu0 0.0
    %1353 = vmatprep.subr.mxu0 0.0
    %1354 = vmatpush1.msra.mxu0 0.0
    %1355 = vmatprep.subr.mxu0 0.0
    %1356 = vmatpush1.msra.mxu0 0.0
    %1357 = vmatprep.subr.mxu0 0.0
    %1358 = vmatpush1.msra.mxu0 0.0
    %1359 = vmatprep.subr.mxu0 0.0
    %1360 = vmatpush1.msra.mxu0 0.0
    %1361 = vmatprep.subr.mxu0 0.0
    %1362 = vmatpush1.msra.mxu0 0.0
    %1363 = vmatprep.subr.mxu0 0.0
    %1364 = vmatpush1.msra.mxu0 0.0
    %1365 = vmatprep.subr.mxu0 0.0
    %1366 = vmatpush1.msra.mxu0 0.0
    %1367 = vmatprep.subr.mxu0 0.0
    %1368 = vmatpush1.msra.mxu0 0.0
    %1369 = vmatprep.subr.mxu0 0.0
    %1370 = vmatpush1.msra.mxu0 0.0
    %1371 = vmatprep.subr.mxu0 0.0
    %1372 = vmatpush1.msra.mxu0 0.0
    %1373 = vmatprep.subr.mxu0 0.0
    %1374 = vmatpush1.msra.mxu0 0.0
    %1375 = vmatprep.mubr.f32.mxu0 0.0
    %1376 = vmatmul.mubr.f32.gmra.mrb[0].mxu0 %v1306
    %v1377 = vpop.f32.mrb[0].mxu0
    %v1378 = vadd.f32 %v1304, %v1377
    %v1379 = vpop.f32.mrb[0].mxu0
    %1380 = vmatprep.mubr.f32.mxu0 0.0
    %1381 = vmatmul.mubr.f32.gmra.mrb[0].mxu0 %v1309
    %v1382 = vpop.f32.mrb[0].mxu0
    %v1383 = vadd.f32 %v1304, %v1382
    %v1384 = vpop.f32.mrb[0].mxu0
    %1385 = vdwg.mxu0
    %s1386 = sld [smem:[#allocation5]]
    %v1387 = vstv %s1386
    %v1388 = vmul.f32 %v1378, %v1387
    %s1389 = sld [smem:[#allocation2]]
    %v1390 = vstv %s1389
    %v1391 = vadd.f32 %v1388, %v1390
    %vm1392 = vcmask 48128
    %1393 = vst.msk [vmem:[%s12] sm:$0xff] %vm1392, %v1391
    %s1394 = sld [smem:[#allocation5 + $0x1]]
    %v1395 = vstv %s1394
    %v1396 = vmul.f32 %v1383, %v1395
    %s1397 = sld [smem:[#allocation2 + $0x1]]
    %v1398 = vstv %s1397
    %v1399 = vadd.f32 %v1396, %v1398
    %s1400 = scalar_lea.vmem %s12, 8
    %1401 = vst.msk [vmem:[%s1400] sm:$0xff] %vm1392, %v1399
    // Predicated region
    $region58: #{strep_forward.1} parent=1 // pred_check
      _
    $region59: #{strep_forward.1} parent=1 // pred_check_branch
      %1403 = sbr.rel (0) target = $region61
    $region60: #{strep_forward.1} parent=1 // pred_region
      _
    $region61: #{strep_forward.1} parent=1 // pred_fallthru
      _
    // Predicated region
    $region62: #{strep_forward.1} parent=1 // pred_check
      _
    $region63: #{strep_forward.1} parent=1 // pred_check_branch
      %1405 = sbr.rel (0) target = $region65
    $region64: #{strep_forward.1} parent=1 // pred_region
      %s1407 = ssub.s32 256, 256
      %1408 = vsyncadd [#allocation3], %s1407
      %s1409 = sshll.u32 [#allocation7], 4
      %s1410 = int_to_ptr.vmem [resolvable:$true] %s1409
      %1415 = dma.vmem_to_hbm [thread:$0]  %s1410, 256, %s13, [#allocation3], 128, 128, 8
    $region65: #{strep_forward.1} parent=1 // pred_fallthru
      _
    // Predicated region
    $region66: #{strep_forward.1} parent=1 // pred_check
      _
    $region67: #{strep_forward.1} parent=1 // pred_check_branch
      %1417 = sbr.rel (0) target = $region69
    $region68: #{strep_forward.1} parent=1 // pred_region
      _
    $region69: #{strep_forward.1} parent=1 // pred_fallthru
      _
    // Predicated region
    $region70: #{strep_forward.1} parent=1 // pred_check
      _
    $region71: #{strep_forward.1} parent=1 // pred_check_branch
      %1419 = sbr.rel (0) target = $region73
    $region72: #{strep_forward.1} parent=1 // pred_region
      %1420 = dma.done [#allocation3], 256
    $region73: #{strep_forward.1} parent=1 // pred_fallthru
      _
    %1421 = vsyncpa [#allocation3], 1
    %1422 = vsyncpa [#allocation4], 1
    %1423 = vsyncpa [#allocation6], 1

</llo_original>
